<compile_context>
chip_gen: v6e
topology: v6e:2x2x1
jax: 0.10.0
libtpu: 0.0.40
codegen_flags: <defaults>
</compile_context>

<pallas_src>
import functools

import jax
import jax.numpy as jnp
from jax import lax
from jax.experimental import pallas as pl
from jax.experimental.pallas import tpu as pltpu


def _full_arch_kernel(n_iterations,
                      x_ref, c_ref, mu_ref, mup_ref, pflat_ref,
                      w_ref, b_ref, alpha_ref, out_ref):
    """All-in-VMEM kernel (one batch tile).

    x_ref     : (Bt, D)      flattened features (zero-padded rows allowed)
    c_ref     : (1, K)       mixture log-weights
    mu_ref    : (K, D)       mixture centers
    mup_ref   : (K, D)       muP_k = P_k mu_k      (precomputed)
    pflat_ref : (D, K*D)     P_flat[d, k*D+e] = P_k[d, e]  (precomputed)
    w_ref     : (D, Npad)    classifier weight, transposed + zero-padded cols
    b_ref     : (1, Npad)    classifier bias, zero-padded
    alpha_ref : (1, 1)       step size (SMEM scalar)
    out_ref   : (Bt, Npad)   padded logits
    """
    Bt, D = x_ref.shape
    K = mu_ref.shape[0]

    x0 = x_ref[...]
    alpha = alpha_ref[0, 0]

    # Loop-invariant values / broadcasts hoisted once (JAX does not CSE
    # broadcast_in_dim; with unroll=True they would be re-emitted per iter).
    c_row = c_ref[...]                                              # (1, K)
    mu_b = jnp.broadcast_to(mu_ref[...][None, :, :], (Bt, K, D))    # (Bt,K,D)
    mup_b = jnp.broadcast_to(mup_ref[...][None, :, :], (Bt, K, D))  # (Bt,K,D)
    pflat = pflat_ref[...]                                          # (D, K*D)

    # One step of gradient ascent on
    #   phi(x) = log sum_k exp(c_k - 0.5 (x-mu_k)^T P_k (x-mu_k))
    # with analytic gradient  -sum_k r_k * P_k (x - mu_k),
    #   r_k = softmax_k(c_k - 0.5 quad_k)   (P_k symmetric).
    def step(_, x_cur):
        # Single lane-dense MXU matmul: (Bt, D) x (D, K*D).
        xP = jnp.dot(x_cur, pflat, preferred_element_type=jnp.float32)
        Pd = xP.reshape(Bt, K, D) - mup_b          # P_k (x - mu_k)   (Bt,K,D)
        diff = x_cur[:, None, :] - mu_b            # (x - mu_k)       (Bt,K,D)
        quad = jnp.sum(diff * Pd, axis=-1)         # (Bt, K), reduce on lanes
        logit = c_row - 0.5 * quad                 # (Bt, K)
        m = jnp.max(logit, axis=-1, keepdims=True)
        e = jnp.exp(logit - m)                     # (Bt, K)
        denom = jnp.sum(e, axis=-1, keepdims=True)           # (Bt, 1)
        num = jnp.sum(e[:, :, None] * Pd, axis=1)            # (Bt, D)
        grad = -num * pl.reciprocal(denom, approx=False)     # single scale
        return x_cur + alpha * grad

    x_final = lax.fori_loop(0, n_iterations, step, x0, unroll=True)

    # Classifier: lane-dense (Bt, D) x (D, Npad) + bias; padded cols are zero.
    out_ref[...] = (jnp.dot(x_final, w_ref[...],
                            preferred_element_type=jnp.float32) + b_ref[...])


def full_architecture_forward(x_nchw, params, n_iterations):
    """JAX wrapper: flatten, precompute P / muP, pad, run the Pallas kernel."""
    B = x_nchw.shape[0]
    feats = x_nchw.reshape(B, -1).astype(jnp.float32)     # nn.Flatten
    D = feats.shape[1]
    K = params['mu'].shape[0]
    n_cls = params['W'].shape[0]

    # --- batch padding (sublane multiple); tile bigger batches over a grid ---
    TILE_B = 8 if B <= 8 else 128
    B_pad = ((B + TILE_B - 1) // TILE_B) * TILE_B
    feats_p = jnp.zeros((B_pad, D), jnp.float32).at[:B].set(feats)

    # --- parameter precompute (hoisted out of the kernel) ---
    A = params['A'].astype(jnp.float32)
    mu = params['mu'].astype(jnp.float32)
    P = jnp.einsum('kdi,kdj->kij', A, A)                   # (K, D, D), symmetric
    muP = jnp.einsum('kd,kde->ke', mu, P)                  # (K, D) = P_k mu_k
    P_flat = jnp.transpose(P, (1, 0, 2)).reshape(D, K * D)  # lane-dense operand

    c_row = params['c'].reshape(1, K).astype(jnp.float32)

    # --- lane-dense (padded) classifier output ---
    N_PAD = ((n_cls + 127) // 128) * 128
    W_pad = jnp.zeros((D, N_PAD), jnp.float32).at[:, :n_cls].set(
        params['W'].T.astype(jnp.float32))
    b_pad = jnp.zeros((1, N_PAD), jnp.float32).at[:, :n_cls].set(
        params['b'].reshape(1, n_cls).astype(jnp.float32))

    alpha = jnp.asarray(params['alpha'], jnp.float32).reshape(1, 1)

    kernel = functools.partial(_full_arch_kernel, n_iterations)

    grid = (B_pad // TILE_B,)

    def const2d(shape):
        return pl.BlockSpec(shape, lambda i: (0, 0))

    in_specs = [
        pl.BlockSpec((TILE_B, D), lambda i: (i, 0)),            # x batch tile
        const2d((1, K)),                                        # c
        const2d((K, D)),                                        # mu
        const2d((K, D)),                                        # muP
        const2d((D, K * D)),                                    # P_flat
        const2d((D, N_PAD)),                                    # W (padded)
        const2d((1, N_PAD)),                                    # b (padded)
        pl.BlockSpec(memory_space=pltpu.MemorySpace.SMEM),      # alpha scalar
    ]
    out_spec = pl.BlockSpec((TILE_B, N_PAD), lambda i: (i, 0))

    # Explicit VMEM budget sized from the resident arrays (double-buffered
    # inputs) plus loop temporaries, clamped to stay within every chip's
    # scoped default (v7x has only 64 MiB physical / 32 MiB scoped).
    resident = (TILE_B * D + K + 2 * K * D + D * K * D
                + D * N_PAD + N_PAD + TILE_B * N_PAD)
    temporaries = 8 * TILE_B * K * D
    vmem_limit = int(min(max(4 * (2 * resident + temporaries), 4 << 20),
                         32 << 20))

    logits_p = pl.pallas_call(
        kernel,
        grid=grid,
        out_shape=jax.ShapeDtypeStruct((B_pad, N_PAD), jnp.float32),
        in_specs=in_specs,
        out_specs=out_spec,
        compiler_params=pltpu.CompilerParams(
            dimension_semantics=("parallel",),
            vmem_limit_bytes=vmem_limit),
    )(feats_p, c_row, mu, muP, P_flat, W_pad, b_pad, alpha)

    return logits_p[:B, :n_cls]


def reference_forward(x_nchw, params, n_iterations):
    """Pure-JAX reference mirroring the PyTorch module semantics."""
    B = x_nchw.shape[0]
    x = x_nchw.reshape(B, -1).astype(jnp.float32)
    c, mu, A = params['c'], params['mu'], params['A']
    alpha, W, b = params['alpha'], params['W'], params['b']
    P = jnp.einsum('kdi,kdj->kij', A, A)
    for _ in range(n_iterations):
        diff = x[:, None, :] - mu[None, :, :]                      # (B, K, D)
        quad = jnp.einsum('bki,kij,bkj->bk', diff, P, diff)        # (B, K)
        r = jax.nn.softmax(c[None, :] - 0.5 * quad, axis=1)        # (B, K)
        Pd = jnp.einsum('bki,kij->bkj', diff, P)                   # (B, K, D)
        grad = -jnp.einsum('bk,bkj->bj', r, Pd)                    # (B, D)
        x = x + alpha * grad
    return x @ W.T + b


if __name__ == "__main__":
    # Small shapes consistent with the module: NCHW input flattened to D=32.
    B, C, H, Wd = 2, 1, 8, 4
    feature_dim = C * H * Wd          # 32
    k = 8
    n_iterations = 4
    n_classes = 10

    key = jax.random.PRNGKey(0)
    k_x, k_mu, k_w, k_b = jax.random.split(key, 4)

    x = jax.random.normal(k_x, (B, C, H, Wd), dtype=jnp.float32)

    # Deterministic parameter init mirroring DenoisingPotential.__init__ and
    # nn.Linear(feature_dim, 10) defaults.
    params = {
        'c': jnp.zeros((k,), jnp.float32),
        'mu': 0.1 * jax.random.normal(k_mu, (k, feature_dim), jnp.float32),
        'A': jnp.broadcast_to(jnp.eye(feature_dim, dtype=jnp.float32),
                              (k, feature_dim, feature_dim)).copy(),
        'alpha': jnp.float32(0.1),
        'W': jax.random.uniform(k_w, (n_classes, feature_dim), jnp.float32,
                                -1.0 / feature_dim ** 0.5,
                                1.0 / feature_dim ** 0.5),
        'b': jax.random.uniform(k_b, (n_classes,), jnp.float32,
                                -1.0 / feature_dim ** 0.5,
                                1.0 / feature_dim ** 0.5),
    }

    logits = full_architecture_forward(x, params, n_iterations)
    jax.block_until_ready(logits)

    ref = reference_forward(x, params, n_iterations)
    assert logits.shape == (B, n_classes)
    assert jnp.allclose(logits, ref, atol=1e-4, rtol=1e-4), (
        "mismatch vs pure-JAX reference")

    print("KERNEL_OK")
</pallas_src>

<mosaic_0001>
module attributes {stable_mosaic.version = 11 : i64} {
  func.func @_full_arch_kernel(%arg0: i32, %arg1: memref<8x32xf32, #tpu.memory_space<vmem>>, %arg2: memref<1x8xf32, #tpu.memory_space<vmem>>, %arg3: memref<8x32xf32, #tpu.memory_space<vmem>>, %arg4: memref<8x32xf32, #tpu.memory_space<vmem>>, %arg5: memref<32x256xf32, #tpu.memory_space<vmem>>, %arg6: memref<32x128xf32, #tpu.memory_space<vmem>>, %arg7: memref<1x128xf32, #tpu.memory_space<vmem>>, %arg8: memref<1x1xf32, #tpu.memory_space<smem>>, %arg9: memref<8x128xf32, #tpu.memory_space<vmem>>) attributes {dimension_semantics = [#tpu.dimension_semantics<parallel>], iteration_bounds = array<i64: 1>, scalar_prefetch = 0 : i64, scratch_operands = 0 : i64, tpu.core_type = #tpu.core_type<tc>, window_params = [{transform_indices = @transform_0, window_bounds = array<i64: 8, 32>}, {pipeline_mode = #tpu.pipeline_mode<synchronous>, transform_indices = @transform_1, window_bounds = array<i64: 1, 8>}, {pipeline_mode = #tpu.pipeline_mode<synchronous>, transform_indices = @transform_2, window_bounds = array<i64: 8, 32>}, {pipeline_mode = #tpu.pipeline_mode<synchronous>, transform_indices = @transform_3, window_bounds = array<i64: 8, 32>}, {pipeline_mode = #tpu.pipeline_mode<synchronous>, transform_indices = @transform_4, window_bounds = array<i64: 32, 256>}, {pipeline_mode = #tpu.pipeline_mode<synchronous>, transform_indices = @transform_5, window_bounds = array<i64: 32, 128>}, {pipeline_mode = #tpu.pipeline_mode<synchronous>, transform_indices = @transform_6, window_bounds = array<i64: 1, 128>}, {transform_indices = @transform_7, window_bounds = array<i64: 1, 1>}, {transform_indices = @transform_8, window_bounds = array<i64: 8, 128>}]} {
    %c0 = arith.constant 0 : index
    %c0_0 = arith.constant 0 : index
    %0 = vector.load %arg1[%c0, %c0_0] : memref<8x32xf32, #tpu.memory_space<vmem>>, vector<8x32xf32>
    %c0_1 = arith.constant 0 : index
    %c0_2 = arith.constant 0 : index
    %1 = memref.load %arg8[%c0_1, %c0_2] : memref<1x1xf32, #tpu.memory_space<smem>>
    %c0_3 = arith.constant 0 : index
    %c0_4 = arith.constant 0 : index
    %2 = vector.load %arg2[%c0_3, %c0_4] : memref<1x8xf32, #tpu.memory_space<vmem>>, vector<1x8xf32>
    %c0_5 = arith.constant 0 : index
    %c0_6 = arith.constant 0 : index
    %3 = vector.load %arg3[%c0_5, %c0_6] : memref<8x32xf32, #tpu.memory_space<vmem>>, vector<8x32xf32>
    %4 = vector.shape_cast %3 : vector<8x32xf32> to vector<1x8x32xf32>
    %5 = vector.shape_cast %4 : vector<1x8x32xf32> to vector<1x8x32xf32>
    %6 = vector.broadcast %5 : vector<1x8x32xf32> to vector<8x8x32xf32>
    %c0_7 = arith.constant 0 : index
    %c0_8 = arith.constant 0 : index
    %7 = vector.load %arg4[%c0_7, %c0_8] : memref<8x32xf32, #tpu.memory_space<vmem>>, vector<8x32xf32>
    %8 = vector.shape_cast %7 : vector<8x32xf32> to vector<1x8x32xf32>
    %9 = vector.shape_cast %8 : vector<1x8x32xf32> to vector<1x8x32xf32>
    %10 = vector.broadcast %9 : vector<1x8x32xf32> to vector<8x8x32xf32>
    %c0_9 = arith.constant 0 : index
    %c0_10 = arith.constant 0 : index
    %11 = vector.load %arg5[%c0_9, %c0_10] : memref<32x256xf32, #tpu.memory_space<vmem>>, vector<32x256xf32>
    %c0_i32 = arith.constant 0 : i32
    %cst = arith.constant dense<0.000000e+00> : vector<8x256xf32>
    %12 = tpu.matmul %0, %11, %cst {dimension_numbers = #tpu.dot_dimension_numbers<[1], [0], [0], [1], [0, 0, 1, 1], [], []>} : vector<8x32xf32>, vector<32x256xf32>, vector<8x256xf32> -> vector<8x256xf32>
    %13 = vector.shape_cast %12 : vector<8x256xf32> to vector<8x8x32xf32>
    %14 = arith.subf %13, %10 : vector<8x8x32xf32>
    %15 = vector.shape_cast %0 : vector<8x32xf32> to vector<8x1x32xf32>
    %16 = vector.broadcast %15 : vector<8x1x32xf32> to vector<8x8x32xf32>
    %17 = arith.subf %16, %6 : vector<8x8x32xf32>
    %18 = arith.mulf %17, %14 : vector<8x8x32xf32>
    %cst_11 = arith.constant dense<0.000000e+00> : vector<8x8xf32>
    %19 = vector.multi_reduction <add>, %18, %cst_11 [2] : vector<8x8x32xf32> to vector<8x8xf32>
    %cst_12 = arith.constant 5.000000e-01 : f32
    %20 = vector.broadcast %cst_12 : f32 to vector<8x8xf32>
    %21 = arith.mulf %20, %19 : vector<8x8xf32>
    %22 = vector.broadcast %2 : vector<1x8xf32> to vector<8x8xf32>
    %23 = arith.subf %22, %21 : vector<8x8xf32>
    %cst_13 = arith.constant dense<0xFF800000> : vector<8xf32>
    %24 = vector.multi_reduction <maximumf>, %23, %cst_13 [1] : vector<8x8xf32> to vector<8xf32>
    %25 = vector.shape_cast %24 : vector<8xf32> to vector<8x1xf32>
    %26 = vector.broadcast %25 : vector<8x1xf32> to vector<8x8xf32>
    %27 = arith.subf %23, %26 : vector<8x8xf32>
    %28 = math.exp %27 : vector<8x8xf32>
    %cst_14 = arith.constant dense<0.000000e+00> : vector<8xf32>
    %29 = vector.multi_reduction <add>, %28, %cst_14 [1] : vector<8x8xf32> to vector<8xf32>
    %30 = vector.shape_cast %29 : vector<8xf32> to vector<8x1xf32>
    %31 = vector.shape_cast %28 : vector<8x8xf32> to vector<8x8x1xf32>
    %32 = vector.broadcast %31 : vector<8x8x1xf32> to vector<8x8x32xf32>
    %33 = arith.mulf %32, %14 : vector<8x8x32xf32>
    %cst_15 = arith.constant dense<0.000000e+00> : vector<8x32xf32>
    %34 = vector.multi_reduction <add>, %33, %cst_15 [1] : vector<8x8x32xf32> to vector<8x32xf32>
    %cst_16 = arith.constant 0.000000e+00 : f32
    %35 = vector.broadcast %cst_16 : f32 to vector<8x32xf32>
    %36 = arith.subf %35, %34 : vector<8x32xf32>
    %37 = tpu.reciprocal %30 : vector<8x1xf32> -> vector<8x1xf32>
    %38 = vector.broadcast %37 : vector<8x1xf32> to vector<8x32xf32>
    %39 = arith.mulf %36, %38 : vector<8x32xf32>
    %40 = vector.broadcast %1 : f32 to vector<8x32xf32>
    %41 = arith.mulf %40, %39 : vector<8x32xf32>
    %42 = arith.addf %0, %41 : vector<8x32xf32>
    %c1_i32 = arith.constant 1 : i32
    %cst_17 = arith.constant dense<0.000000e+00> : vector<8x256xf32>
    %43 = tpu.matmul %42, %11, %cst_17 {dimension_numbers = #tpu.dot_dimension_numbers<[1], [0], [0], [1], [0, 0, 1, 1], [], []>} : vector<8x32xf32>, vector<32x256xf32>, vector<8x256xf32> -> vector<8x256xf32>
    %44 = vector.shape_cast %43 : vector<8x256xf32> to vector<8x8x32xf32>
    %45 = arith.subf %44, %10 : vector<8x8x32xf32>
    %46 = vector.shape_cast %42 : vector<8x32xf32> to vector<8x1x32xf32>
    %47 = vector.broadcast %46 : vector<8x1x32xf32> to vector<8x8x32xf32>
    %48 = arith.subf %47, %6 : vector<8x8x32xf32>
    %49 = arith.mulf %48, %45 : vector<8x8x32xf32>
    %cst_18 = arith.constant dense<0.000000e+00> : vector<8x8xf32>
    %50 = vector.multi_reduction <add>, %49, %cst_18 [2] : vector<8x8x32xf32> to vector<8x8xf32>
    %cst_19 = arith.constant 5.000000e-01 : f32
    %51 = vector.broadcast %cst_19 : f32 to vector<8x8xf32>
    %52 = arith.mulf %51, %50 : vector<8x8xf32>
    %53 = vector.broadcast %2 : vector<1x8xf32> to vector<8x8xf32>
    %54 = arith.subf %53, %52 : vector<8x8xf32>
    %cst_20 = arith.constant dense<0xFF800000> : vector<8xf32>
    %55 = vector.multi_reduction <maximumf>, %54, %cst_20 [1] : vector<8x8xf32> to vector<8xf32>
    %56 = vector.shape_cast %55 : vector<8xf32> to vector<8x1xf32>
    %57 = vector.broadcast %56 : vector<8x1xf32> to vector<8x8xf32>
    %58 = arith.subf %54, %57 : vector<8x8xf32>
    %59 = math.exp %58 : vector<8x8xf32>
    %cst_21 = arith.constant dense<0.000000e+00> : vector<8xf32>
    %60 = vector.multi_reduction <add>, %59, %cst_21 [1] : vector<8x8xf32> to vector<8xf32>
    %61 = vector.shape_cast %60 : vector<8xf32> to vector<8x1xf32>
    %62 = vector.shape_cast %59 : vector<8x8xf32> to vector<8x8x1xf32>
    %63 = vector.broadcast %62 : vector<8x8x1xf32> to vector<8x8x32xf32>
    %64 = arith.mulf %63, %45 : vector<8x8x32xf32>
    %cst_22 = arith.constant dense<0.000000e+00> : vector<8x32xf32>
    %65 = vector.multi_reduction <add>, %64, %cst_22 [1] : vector<8x8x32xf32> to vector<8x32xf32>
    %cst_23 = arith.constant 0.000000e+00 : f32
    %66 = vector.broadcast %cst_23 : f32 to vector<8x32xf32>
    %67 = arith.subf %66, %65 : vector<8x32xf32>
    %68 = tpu.reciprocal %61 : vector<8x1xf32> -> vector<8x1xf32>
    %69 = vector.broadcast %68 : vector<8x1xf32> to vector<8x32xf32>
    %70 = arith.mulf %67, %69 : vector<8x32xf32>
    %71 = vector.broadcast %1 : f32 to vector<8x32xf32>
    %72 = arith.mulf %71, %70 : vector<8x32xf32>
    %73 = arith.addf %42, %72 : vector<8x32xf32>
    %c2_i32 = arith.constant 2 : i32
    %cst_24 = arith.constant dense<0.000000e+00> : vector<8x256xf32>
    %74 = tpu.matmul %73, %11, %cst_24 {dimension_numbers = #tpu.dot_dimension_numbers<[1], [0], [0], [1], [0, 0, 1, 1], [], []>} : vector<8x32xf32>, vector<32x256xf32>, vector<8x256xf32> -> vector<8x256xf32>
    %75 = vector.shape_cast %74 : vector<8x256xf32> to vector<8x8x32xf32>
    %76 = arith.subf %75, %10 : vector<8x8x32xf32>
    %77 = vector.shape_cast %73 : vector<8x32xf32> to vector<8x1x32xf32>
    %78 = vector.broadcast %77 : vector<8x1x32xf32> to vector<8x8x32xf32>
    %79 = arith.subf %78, %6 : vector<8x8x32xf32>
    %80 = arith.mulf %79, %76 : vector<8x8x32xf32>
    %cst_25 = arith.constant dense<0.000000e+00> : vector<8x8xf32>
    %81 = vector.multi_reduction <add>, %80, %cst_25 [2] : vector<8x8x32xf32> to vector<8x8xf32>
    %cst_26 = arith.constant 5.000000e-01 : f32
    %82 = vector.broadcast %cst_26 : f32 to vector<8x8xf32>
    %83 = arith.mulf %82, %81 : vector<8x8xf32>
    %84 = vector.broadcast %2 : vector<1x8xf32> to vector<8x8xf32>
    %85 = arith.subf %84, %83 : vector<8x8xf32>
    %cst_27 = arith.constant dense<0xFF800000> : vector<8xf32>
    %86 = vector.multi_reduction <maximumf>, %85, %cst_27 [1] : vector<8x8xf32> to vector<8xf32>
    %87 = vector.shape_cast %86 : vector<8xf32> to vector<8x1xf32>
    %88 = vector.broadcast %87 : vector<8x1xf32> to vector<8x8xf32>
    %89 = arith.subf %85, %88 : vector<8x8xf32>
    %90 = math.exp %89 : vector<8x8xf32>
    %cst_28 = arith.constant dense<0.000000e+00> : vector<8xf32>
    %91 = vector.multi_reduction <add>, %90, %cst_28 [1] : vector<8x8xf32> to vector<8xf32>
    %92 = vector.shape_cast %91 : vector<8xf32> to vector<8x1xf32>
    %93 = vector.shape_cast %90 : vector<8x8xf32> to vector<8x8x1xf32>
    %94 = vector.broadcast %93 : vector<8x8x1xf32> to vector<8x8x32xf32>
    %95 = arith.mulf %94, %76 : vector<8x8x32xf32>
    %cst_29 = arith.constant dense<0.000000e+00> : vector<8x32xf32>
    %96 = vector.multi_reduction <add>, %95, %cst_29 [1] : vector<8x8x32xf32> to vector<8x32xf32>
    %cst_30 = arith.constant 0.000000e+00 : f32
    %97 = vector.broadcast %cst_30 : f32 to vector<8x32xf32>
    %98 = arith.subf %97, %96 : vector<8x32xf32>
    %99 = tpu.reciprocal %92 : vector<8x1xf32> -> vector<8x1xf32>
    %100 = vector.broadcast %99 : vector<8x1xf32> to vector<8x32xf32>
    %101 = arith.mulf %98, %100 : vector<8x32xf32>
    %102 = vector.broadcast %1 : f32 to vector<8x32xf32>
    %103 = arith.mulf %102, %101 : vector<8x32xf32>
    %104 = arith.addf %73, %103 : vector<8x32xf32>
    %c3_i32 = arith.constant 3 : i32
    %cst_31 = arith.constant dense<0.000000e+00> : vector<8x256xf32>
    %105 = tpu.matmul %104, %11, %cst_31 {dimension_numbers = #tpu.dot_dimension_numbers<[1], [0], [0], [1], [0, 0, 1, 1], [], []>} : vector<8x32xf32>, vector<32x256xf32>, vector<8x256xf32> -> vector<8x256xf32>
    %106 = vector.shape_cast %105 : vector<8x256xf32> to vector<8x8x32xf32>
    %107 = arith.subf %106, %10 : vector<8x8x32xf32>
    %108 = vector.shape_cast %104 : vector<8x32xf32> to vector<8x1x32xf32>
    %109 = vector.broadcast %108 : vector<8x1x32xf32> to vector<8x8x32xf32>
    %110 = arith.subf %109, %6 : vector<8x8x32xf32>
    %111 = arith.mulf %110, %107 : vector<8x8x32xf32>
    %cst_32 = arith.constant dense<0.000000e+00> : vector<8x8xf32>
    %112 = vector.multi_reduction <add>, %111, %cst_32 [2] : vector<8x8x32xf32> to vector<8x8xf32>
    %cst_33 = arith.constant 5.000000e-01 : f32
    %113 = vector.broadcast %cst_33 : f32 to vector<8x8xf32>
    %114 = arith.mulf %113, %112 : vector<8x8xf32>
    %115 = vector.broadcast %2 : vector<1x8xf32> to vector<8x8xf32>
    %116 = arith.subf %115, %114 : vector<8x8xf32>
    %cst_34 = arith.constant dense<0xFF800000> : vector<8xf32>
    %117 = vector.multi_reduction <maximumf>, %116, %cst_34 [1] : vector<8x8xf32> to vector<8xf32>
    %118 = vector.shape_cast %117 : vector<8xf32> to vector<8x1xf32>
    %119 = vector.broadcast %118 : vector<8x1xf32> to vector<8x8xf32>
    %120 = arith.subf %116, %119 : vector<8x8xf32>
    %121 = math.exp %120 : vector<8x8xf32>
    %cst_35 = arith.constant dense<0.000000e+00> : vector<8xf32>
    %122 = vector.multi_reduction <add>, %121, %cst_35 [1] : vector<8x8xf32> to vector<8xf32>
    %123 = vector.shape_cast %122 : vector<8xf32> to vector<8x1xf32>
    %124 = vector.shape_cast %121 : vector<8x8xf32> to vector<8x8x1xf32>
    %125 = vector.broadcast %124 : vector<8x8x1xf32> to vector<8x8x32xf32>
    %126 = arith.mulf %125, %107 : vector<8x8x32xf32>
    %cst_36 = arith.constant dense<0.000000e+00> : vector<8x32xf32>
    %127 = vector.multi_reduction <add>, %126, %cst_36 [1] : vector<8x8x32xf32> to vector<8x32xf32>
    %cst_37 = arith.constant 0.000000e+00 : f32
    %128 = vector.broadcast %cst_37 : f32 to vector<8x32xf32>
    %129 = arith.subf %128, %127 : vector<8x32xf32>
    %130 = tpu.reciprocal %123 : vector<8x1xf32> -> vector<8x1xf32>
    %131 = vector.broadcast %130 : vector<8x1xf32> to vector<8x32xf32>
    %132 = arith.mulf %129, %131 : vector<8x32xf32>
    %133 = vector.broadcast %1 : f32 to vector<8x32xf32>
    %134 = arith.mulf %133, %132 : vector<8x32xf32>
    %135 = arith.addf %104, %134 : vector<8x32xf32>
    %c0_38 = arith.constant 0 : index
    %c0_39 = arith.constant 0 : index
    %136 = vector.load %arg6[%c0_38, %c0_39] : memref<32x128xf32, #tpu.memory_space<vmem>>, vector<32x128xf32>
    %cst_40 = arith.constant dense<0.000000e+00> : vector<8x128xf32>
    %137 = tpu.matmul %135, %136, %cst_40 {dimension_numbers = #tpu.dot_dimension_numbers<[1], [0], [0], [1], [0, 0, 1, 1], [], []>} : vector<8x32xf32>, vector<32x128xf32>, vector<8x128xf32> -> vector<8x128xf32>
    %c0_41 = arith.constant 0 : index
    %c0_42 = arith.constant 0 : index
    %138 = vector.load %arg7[%c0_41, %c0_42] : memref<1x128xf32, #tpu.memory_space<vmem>>, vector<1x128xf32>
    %139 = vector.broadcast %138 : vector<1x128xf32> to vector<8x128xf32>
    %140 = arith.addf %137, %139 : vector<8x128xf32>
    %c0_43 = arith.constant 0 : index
    %c0_44 = arith.constant 0 : index
    %141 = vector.load %arg9[%c0_43, %c0_44] : memref<8x128xf32, #tpu.memory_space<vmem>>, vector<8x128xf32>
    tpu.vector_store %arg9[%c0_43, %c0_44], %140 {strides = array<i32>} : memref<8x128xf32, #tpu.memory_space<vmem>>, vector<8x128xf32>,
    return
  }
  func.func @transform_0(%arg0: i32) -> (i32, i32) {
    %c0_i32 = arith.constant 0 : i32
    %c0_i32_0 = arith.constant 0 : i32
    return %arg0, %c0_i32 : i32, i32
  }
  func.func @transform_1(%arg0: i32) -> (i32, i32) {
    %c0_i32 = arith.constant 0 : i32
    %c0_i32_0 = arith.constant 0 : i32
    %c0_i32_1 = arith.constant 0 : i32
    return %c0_i32, %c0_i32_0 : i32, i32
  }
  func.func @transform_2(%arg0: i32) -> (i32, i32) {
    %c0_i32 = arith.constant 0 : i32
    %c0_i32_0 = arith.constant 0 : i32
    %c0_i32_1 = arith.constant 0 : i32
    return %c0_i32, %c0_i32_0 : i32, i32
  }
  func.func @transform_3(%arg0: i32) -> (i32, i32) {
    %c0_i32 = arith.constant 0 : i32
    %c0_i32_0 = arith.constant 0 : i32
    %c0_i32_1 = arith.constant 0 : i32
    return %c0_i32, %c0_i32_0 : i32, i32
  }
  func.func @transform_4(%arg0: i32) -> (i32, i32) {
    %c0_i32 = arith.constant 0 : i32
    %c0_i32_0 = arith.constant 0 : i32
    %c0_i32_1 = arith.constant 0 : i32
    return %c0_i32, %c0_i32_0 : i32, i32
  }
  func.func @transform_5(%arg0: i32) -> (i32, i32) {
    %c0_i32 = arith.constant 0 : i32
    %c0_i32_0 = arith.constant 0 : i32
    %c0_i32_1 = arith.constant 0 : i32
    return %c0_i32, %c0_i32_0 : i32, i32
  }
  func.func @transform_6(%arg0: i32) -> (i32, i32) {
    %c0_i32 = arith.constant 0 : i32
    %c0_i32_0 = arith.constant 0 : i32
    %c0_i32_1 = arith.constant 0 : i32
    return %c0_i32, %c0_i32_0 : i32, i32
  }
  func.func @transform_7(%arg0: i32) -> (i32, i32) {
    %c0_i32 = arith.constant 0 : i32
    %c0_i32_0 = arith.constant 0 : i32
    %c0_i32_1 = arith.constant 0 : i32
    return %c0_i32, %c0_i32_0 : i32, i32
  }
  func.func @transform_8(%arg0: i32) -> (i32, i32) {
    %c0_i32 = arith.constant 0 : i32
    %c0_i32_0 = arith.constant 0 : i32
    return %arg0, %c0_i32 : i32, i32
  }
}

</mosaic_0001>

<llo_original>
// kernel: tpu_custom_call.1
$region0: #{tpu_custom_call.1}
  #allocation0 [shape = 'u32[]', space=smem, size = 0x4, offset = 0x4, fixed_abs, tag = 'smem constant byte address 0x4 - core index']
  #allocation1 [shape = 'u32[144,128]{1,0:T(1,128)}', space=vmem, size = 0x12000, scoped, tag = 'internal scratch']
  #allocation2 [shape = 'f32[1,1]{1,0:T(1,128)S(6)}', space=smem, size = 0x200, scoped, tag = 'scoped memory for tpu_custom_call.1']
  %s0 = inlined_call_operand.hbm [shape: f32[8,32], index: 0, kind: input, shape index: {}]
  %s1 = inlined_call_operand.vmem [shape: f32[1,8], index: 1, kind: input, shape index: {}]
  %s2 = inlined_call_operand.hbm [shape: f32[8,32], index: 2, kind: input, shape index: {}]
  %s3 = inlined_call_operand.hbm [shape: f32[8,32], index: 3, kind: input, shape index: {}]
  %s4 = inlined_call_operand.hbm [shape: f32[32,256], index: 4, kind: input, shape index: {}]
  %s5 = inlined_call_operand.hbm [shape: f32[32,128], index: 5, kind: input, shape index: {}]
  %s6 = inlined_call_operand.vmem [shape: f32[1,128], index: 6, kind: input, shape index: {}]
  %s7 = inlined_call_operand.<no memory space> [shape: f32[1,1], index: 7, kind: input, shape index: {}]
  %s8 = inlined_call_operand.hbm [shape: f32[8,128], index: 8, kind: output, shape index: {}]
  %s9 = sld [smem:[#allocation0]]
  $region62: #{tpu_custom_call.1} parent=0
    _
  %s11 = ssub.s32 1, %s9
  %s12 = scalar_select 0, %s11, %s9
  %13 = sst [smem:[#allocation2]] %s7
  $region1: #{tpu_custom_call.1} parent=0
    #allocation3 [shape = 'u8[4096]{0}', space=vmem, size = 0x1000, scoped, tag = 'input window, operand 0, single buffered']
    #allocation4 [shape = 's32[1]{0}', space=sflag, size = 0x4, scoped, tag = 'scoped memory for tpu_custom_call.1']
    #allocation5 [shape = 's32[1]{0}', space=sflag, size = 0x4, scoped, tag = 'scoped memory for tpu_custom_call.1']
    #allocation6 [shape = 'u8[4096]{0}', space=vmem, size = 0x1000, scoped, tag = 'input window, operand 2, single buffered']
    #allocation7 [shape = 's32[1]{0}', space=sflag, size = 0x4, scoped, tag = 'scoped memory for tpu_custom_call.1']
    #allocation8 [shape = 'u8[4096]{0}', space=vmem, size = 0x1000, scoped, tag = 'input window, operand 3, single buffered']
    #allocation9 [shape = 'u8[32768]{0}', space=vmem, size = 0x8000, scoped, tag = 'input window, operand 4, single buffered']
    #allocation10 [shape = 's32[1]{0}', space=sflag, size = 0x4, scoped, tag = 'scoped memory for tpu_custom_call.1']
    #allocation11 [shape = 'u8[16384]{0}', space=vmem, size = 0x4000, scoped, tag = 'input window, operand 5, single buffered']
    #allocation12 [shape = 'u8[4096]{0}', space=vmem, size = 0x1000, scoped, tag = 'output window, operand 0, single buffered']
    %14 = vsyncpa [#allocation4], 0
    %15 = vsyncpa [#allocation7], 0
    %16 = vsyncpa [#allocation10], 0
    %17 = vsyncpa [#allocation5], 0
    // Predicated region
    $region2: #{tpu_custom_call.1} parent=1 // pred_check
      _
    $region3: #{tpu_custom_call.1} parent=1 // pred_check_branch
      %19 = sbr.rel (0) target = $region5
    $region4: #{tpu_custom_call.1} parent=1 // pred_region
      %s21 = ssub.s32 128, 128
      %22 = vsyncadd [#allocation4], %s21
      %s24 = sshll.u32 [#allocation3], 4
      %s25 = int_to_ptr.vmem [resolvable:$true] %s24
      %27 = dma.hbm_to_vmem [thread:$0]  %s0, 128, %s25, [#allocation4]
    $region5: #{tpu_custom_call.1} parent=1 // pred_fallthru
      _
    // Predicated region
    $region6: #{tpu_custom_call.1} parent=1 // pred_check
      _
    $region7: #{tpu_custom_call.1} parent=1 // pred_check_branch
      %29 = sbr.rel (0) target = $region9
    $region8: #{tpu_custom_call.1} parent=1 // pred_region
      _
    $region9: #{tpu_custom_call.1} parent=1 // pred_fallthru
      _
    // Predicated region
    $region10: #{tpu_custom_call.1} parent=1 // pred_check
      _
    $region11: #{tpu_custom_call.1} parent=1 // pred_check_branch
      %31 = sbr.rel (0) target = $region13
    $region12: #{tpu_custom_call.1} parent=1 // pred_region
      %s33 = ssub.s32 128, 128
      %34 = vsyncadd [#allocation7], %s33
      %s36 = sshll.u32 [#allocation6], 4
      %s37 = int_to_ptr.vmem [resolvable:$true] %s36
      %39 = dma.hbm_to_vmem [thread:$0]  %s2, 128, %s37, [#allocation7]
    $region13: #{tpu_custom_call.1} parent=1 // pred_fallthru
      _
    // Predicated region
    $region14: #{tpu_custom_call.1} parent=1 // pred_check
      _
    $region15: #{tpu_custom_call.1} parent=1 // pred_check_branch
      %41 = sbr.rel (0) target = $region17
    $region16: #{tpu_custom_call.1} parent=1 // pred_region
      %s43 = ssub.s32 128, 128
      %44 = vsyncadd [#allocation7], %s43
      %s46 = sshll.u32 [#allocation8], 4
      %s47 = int_to_ptr.vmem [resolvable:$true] %s46
      %49 = dma.hbm_to_vmem [thread:$0]  %s3, 128, %s47, [#allocation7]
    $region17: #{tpu_custom_call.1} parent=1 // pred_fallthru
      _
    // Predicated region
    $region18: #{tpu_custom_call.1} parent=1 // pred_check
      _
    $region19: #{tpu_custom_call.1} parent=1 // pred_check_branch
      %51 = sbr.rel (0) target = $region21
    $region20: #{tpu_custom_call.1} parent=1 // pred_region
      %s53 = ssub.s32 1024, 1024
      %54 = vsyncadd [#allocation10], %s53
      %s55 = sshll.u32 [#allocation9], 4
      %s56 = int_to_ptr.vmem [resolvable:$true] %s55
      %61 = dma.hbm_to_vmem [thread:$0]  %s4, 1024, %s56, [#allocation10], 256, 256, 16
    $region21: #{tpu_custom_call.1} parent=1 // pred_fallthru
      _
    // Predicated region
    $region22: #{tpu_custom_call.1} parent=1 // pred_check
      _
    $region23: #{tpu_custom_call.1} parent=1 // pred_check_branch
      %63 = sbr.rel (0) target = $region25
    $region24: #{tpu_custom_call.1} parent=1 // pred_region
      %s65 = ssub.s32 512, 512
      %66 = vsyncadd [#allocation10], %s65
      %s67 = sshll.u32 [#allocation11], 4
      %s68 = int_to_ptr.vmem [resolvable:$true] %s67
      %73 = dma.hbm_to_vmem [thread:$0]  %s5, 512, %s68, [#allocation10], 128, 128, 8
    $region25: #{tpu_custom_call.1} parent=1 // pred_fallthru
      _
    // Predicated region
    $region26: #{tpu_custom_call.1} parent=1 // pred_check
      _
    $region27: #{tpu_custom_call.1} parent=1 // pred_check_branch
      %75 = sbr.rel (0) target = $region29
    $region28: #{tpu_custom_call.1} parent=1 // pred_region
      _
    $region29: #{tpu_custom_call.1} parent=1 // pred_fallthru
      _
    // Predicated region
    $region30: #{tpu_custom_call.1} parent=1 // pred_check
      _
    $region31: #{tpu_custom_call.1} parent=1 // pred_check_branch
      %77 = sbr.rel (0) target = $region33
    $region32: #{tpu_custom_call.1} parent=1 // pred_region
      _
    $region33: #{tpu_custom_call.1} parent=1 // pred_fallthru
      _
    // Predicated region
    $region34: #{tpu_custom_call.1} parent=1 // pred_check
      _
    $region35: #{tpu_custom_call.1} parent=1 // pred_check_branch
      %79 = sbr.rel (0) target = $region37
    $region36: #{tpu_custom_call.1} parent=1 // pred_region
      %80 = dma.done [#allocation4], 128
    $region37: #{tpu_custom_call.1} parent=1 // pred_fallthru
      _
    // Predicated region
    $region38: #{tpu_custom_call.1} parent=1 // pred_check
      _
    $region39: #{tpu_custom_call.1} parent=1 // pred_check_branch
      %82 = sbr.rel (0) target = $region41
    $region40: #{tpu_custom_call.1} parent=1 // pred_region
      %83 = dma.done [#allocation7], 128
    $region41: #{tpu_custom_call.1} parent=1 // pred_fallthru
      _
    // Predicated region
    $region42: #{tpu_custom_call.1} parent=1 // pred_check
      _
    $region43: #{tpu_custom_call.1} parent=1 // pred_check_branch
      %85 = sbr.rel (0) target = $region45
    $region44: #{tpu_custom_call.1} parent=1 // pred_region
      %86 = dma.done [#allocation7], 128
    $region45: #{tpu_custom_call.1} parent=1 // pred_fallthru
      _
    // Predicated region
    $region46: #{tpu_custom_call.1} parent=1 // pred_check
      _
    $region47: #{tpu_custom_call.1} parent=1 // pred_check_branch
      %88 = sbr.rel (0) target = $region49
    $region48: #{tpu_custom_call.1} parent=1 // pred_region
      %89 = dma.done [#allocation10], 1024
    $region49: #{tpu_custom_call.1} parent=1 // pred_fallthru
      _
    // Predicated region
    $region50: #{tpu_custom_call.1} parent=1 // pred_check
      _
    $region51: #{tpu_custom_call.1} parent=1 // pred_check_branch
      %91 = sbr.rel (0) target = $region53
    $region52: #{tpu_custom_call.1} parent=1 // pred_region
      %92 = dma.done [#allocation10], 512
    $region53: #{tpu_custom_call.1} parent=1 // pred_fallthru
      _
    %v93 = vld [vmem:[#allocation3] sm:$0xff]
    %s94 = sld [smem:[#allocation2]]
    %v95 = vld [vmem:[%s1] sm:$0x1]
    %v96 = vld [vmem:[#allocation6] sm:$0xff]
    %v97 = vld [vmem:[#allocation8] sm:$0xff]
    %v98 = vld [vmem:[#allocation9] sm:$0xff]
    %v99 = vld [vmem:[#allocation9 + $0x8] sm:$0xff]
    %v100 = vld [vmem:[#allocation9 + $0x10] sm:$0xff]
    %v101 = vld [vmem:[#allocation9 + $0x18] sm:$0xff]
    %v102 = vld [vmem:[#allocation9 + $0x20] sm:$0xff]
    %v103 = vld [vmem:[#allocation9 + $0x28] sm:$0xff]
    %v104 = vld [vmem:[#allocation9 + $0x30] sm:$0xff]
    %v105 = vld [vmem:[#allocation9 + $0x38] sm:$0xff]
    %vm106 = vcmask 261120
    %v108 = vsel %vm106, %v93, 0
    %110 = vmatprep.subr.mxu0 0.0
    %111 = vmatpush1.msra.mxu0 0.0
    %112 = vmatprep.subr.mxu0 0.0
    %113 = vmatpush1.msra.mxu0 0.0
    %114 = vmatprep.subr.mxu0 0.0
    %115 = vmatpush1.msra.mxu0 0.0
    %116 = vmatprep.subr.mxu0 0.0
    %117 = vmatpush1.msra.mxu0 0.0
    %118 = vmatprep.subr.mxu0 0.0
    %119 = vmatpush1.msra.mxu0 0.0
    %120 = vmatprep.subr.mxu0 0.0
    %121 = vmatpush1.msra.mxu0 0.0
    %122 = vmatprep.subr.mxu0 0.0
    %123 = vmatpush1.msra.mxu0 0.0
    %124 = vmatprep.subr.mxu0 0.0
    %125 = vmatpush1.msra.mxu0 0.0
    %126 = vmatprep.subr.mxu0 0.0
    %127 = vmatpush1.msra.mxu0 0.0
    %128 = vmatprep.subr.mxu0 0.0
    %129 = vmatpush1.msra.mxu0 0.0
    %130 = vmatprep.subr.mxu0 0.0
    %131 = vmatpush1.msra.mxu0 0.0
    %132 = vmatprep.subr.mxu0 0.0
    %133 = vmatpush1.msra.mxu0 0.0
    %134 = vmatprep.subr.mxu0 %v105
    %135 = vmatpush1.msra.mxu0 %v104
    %136 = vmatprep.subr.mxu0 %v103
    %137 = vmatpush1.msra.mxu0 %v102
    %138 = vmatprep.subr.mxu0 %v101
    %139 = vmatpush1.msra.mxu0 %v100
    %140 = vmatprep.subr.mxu0 %v99
    %141 = vmatpush1.msra.mxu0 %v98
    %142 = vmatprep.subr.mxu0 0.0
    %143 = vmatpush2.msra.mxu0 0.0
    %144 = vmatprep.subr.mxu0 0.0
    %145 = vmatpush2.msra.mxu0 0.0
    %146 = vmatprep.subr.mxu0 0.0
    %147 = vmatpush2.msra.mxu0 0.0
    %148 = vmatprep.subr.mxu0 0.0
    %149 = vmatpush2.msra.mxu0 0.0
    %150 = vmatprep.subr.mxu0 0.0
    %151 = vmatpush2.msra.mxu0 0.0
    %152 = vmatprep.subr.mxu0 0.0
    %153 = vmatpush2.msra.mxu0 0.0
    %154 = vmatprep.subr.mxu0 0.0
    %155 = vmatpush2.msra.mxu0 0.0
    %156 = vmatprep.subr.mxu0 0.0
    %157 = vmatpush2.msra.mxu0 0.0
    %158 = vmatprep.subr.mxu0 0.0
    %159 = vmatpush2.msra.mxu0 0.0
    %160 = vmatprep.subr.mxu0 0.0
    %161 = vmatpush2.msra.mxu0 0.0
    %162 = vmatprep.subr.mxu0 0.0
    %163 = vmatpush2.msra.mxu0 0.0
    %164 = vmatprep.subr.mxu0 0.0
    %165 = vmatpush2.msra.mxu0 0.0
    %166 = vmatprep.subr.mxu0 0.0
    %167 = vmatpush2.msra.mxu0 0.0
    %168 = vmatprep.subr.mxu0 0.0
    %169 = vmatpush2.msra.mxu0 0.0
    %170 = vmatprep.subr.mxu0 0.0
    %171 = vmatpush2.msra.mxu0 0.0
    %172 = vmatprep.subr.mxu0 0.0
    %173 = vmatpush2.msra.mxu0 0.0
    %174 = vmatprep.mubr.f32.mxu0 0.0
    %175 = vmatmul.mubr.f32.gmra.mxu0 %v108
    %v176 = vpop.f32.mrf.mxu0
    %v177 = vadd.f32 0.0, %v176
    %v178 = vpop.f32.mrf.mxu0
    %v179 = vadd.f32 0.0, %v178
    %180 = vdwg.mxu0
    %182 = vrot.lane.b32.xlu0 %v177, 96
    %v183 = vpop.permute.xlu0 %182
    %185 = vrot.lane.b32.xlu0 %v177, 64
    %v186 = vpop.permute.xlu0 %185
    %188 = vrot.lane.b32.xlu0 %v177, 32
    %v189 = vpop.permute.xlu0 %188
    %192 = vrot.lane.b32.xlu0 %v179, 96
    %v193 = vpop.permute.xlu0 %192
    %195 = vrot.lane.b32.xlu0 %v179, 64
    %v196 = vpop.permute.xlu0 %195
    %198 = vrot.lane.b32.xlu0 %v179, 32
    %v199 = vpop.permute.xlu0 %198
    %v201 = vcombine.low %v177, %v186
    %v202 = vcombine.high %v177, %v186
    %v204 = vunpack.c.l.s4 1983009808
    %v205 = vunpack.c.0.s8 %v204
    %v206 = vlaneseq
    %v207 = vshrl.u32 %v206, 7
    %v208 = vsub.s32 %v205, %v207
    %v209 = vrot.slane %v201, %v208
    %v211 = vunpack.c.l.s4 1983009808
    %v212 = vunpack.c.0.s8 %v211
    %v213 = vlaneseq
    %v214 = vshrl.u32 %v213, 7
    %v215 = vsub.s32 %v212, %v214
    %v216 = vrot.slane %v202, %v215
    %v217 = vcombine.low %v183, %v189
    %v218 = vcombine.high %v183, %v189
    %v220 = vunpack.c.l.s4 1983009808
    %v221 = vunpack.c.0.s8 %v220
    %v222 = vlaneseq
    %v223 = vshrl.u32 %v222, 7
    %v224 = vsub.s32 %v221, %v223
    %v225 = vrot.slane %v217, %v224
    %v227 = vunpack.c.l.s4 1983009808
    %v228 = vunpack.c.0.s8 %v227
    %v229 = vlaneseq
    %v230 = vshrl.u32 %v229, 7
    %v231 = vsub.s32 %v228, %v230
    %v232 = vrot.slane %v218, %v231
    %v233 = vcombine.low %v179, %v196
    %v234 = vcombine.high %v179, %v196
    %v236 = vunpack.c.l.s4 1983009808
    %v237 = vunpack.c.0.s8 %v236
    %v238 = vlaneseq
    %v239 = vshrl.u32 %v238, 7
    %v240 = vsub.s32 %v237, %v239
    %v241 = vrot.slane %v233, %v240
    %v243 = vunpack.c.l.s4 1983009808
    %v244 = vunpack.c.0.s8 %v243
    %v245 = vlaneseq
    %v246 = vshrl.u32 %v245, 7
    %v247 = vsub.s32 %v244, %v246
    %v248 = vrot.slane %v234, %v247
    %v249 = vcombine.low %v193, %v199
    %v250 = vcombine.high %v193, %v199
    %v252 = vunpack.c.l.s4 1983009808
    %v253 = vunpack.c.0.s8 %v252
    %v254 = vlaneseq
    %v255 = vshrl.u32 %v254, 7
    %v256 = vsub.s32 %v253, %v255
    %v257 = vrot.slane %v249, %v256
    %v259 = vunpack.c.l.s4 1983009808
    %v260 = vunpack.c.0.s8 %v259
    %v261 = vlaneseq
    %v262 = vshrl.u32 %v261, 7
    %v263 = vsub.s32 %v260, %v262
    %v264 = vrot.slane %v250, %v263
    %v265 = vcombine.low %v209, %v225
    %v266 = vcombine.high %v209, %v225
    %v268 = vunpack.c.l.s4 1934713408
    %v269 = vunpack.c.0.s8 %v268
    %v270 = vlaneseq
    %v271 = vshrl.u32 %v270, 7
    %v272 = vsub.s32 %v269, %v271
    %v273 = vrot.slane %v265, %v272
    %v275 = vunpack.c.l.s4 1934713408
    %v276 = vunpack.c.0.s8 %v275
    %v277 = vlaneseq
    %v278 = vshrl.u32 %v277, 7
    %v279 = vsub.s32 %v276, %v278
    %v280 = vrot.slane %v266, %v279
    %v281 = vcombine.low %v216, %v232
    %v282 = vcombine.high %v216, %v232
    %v284 = vunpack.c.l.s4 1934713408
    %v285 = vunpack.c.0.s8 %v284
    %v286 = vlaneseq
    %v287 = vshrl.u32 %v286, 7
    %v288 = vsub.s32 %v285, %v287
    %v289 = vrot.slane %v281, %v288
    %v291 = vunpack.c.l.s4 1934713408
    %v292 = vunpack.c.0.s8 %v291
    %v293 = vlaneseq
    %v294 = vshrl.u32 %v293, 7
    %v295 = vsub.s32 %v292, %v294
    %v296 = vrot.slane %v282, %v295
    %v297 = vcombine.low %v241, %v257
    %v298 = vcombine.high %v241, %v257
    %v300 = vunpack.c.l.s4 1934713408
    %v301 = vunpack.c.0.s8 %v300
    %v302 = vlaneseq
    %v303 = vshrl.u32 %v302, 7
    %v304 = vsub.s32 %v301, %v303
    %v305 = vrot.slane %v297, %v304
    %v307 = vunpack.c.l.s4 1934713408
    %v308 = vunpack.c.0.s8 %v307
    %v309 = vlaneseq
    %v310 = vshrl.u32 %v309, 7
    %v311 = vsub.s32 %v308, %v310
    %v312 = vrot.slane %v298, %v311
    %v313 = vcombine.low %v248, %v264
    %v314 = vcombine.high %v248, %v264
    %v316 = vunpack.c.l.s4 1934713408
    %v317 = vunpack.c.0.s8 %v316
    %v318 = vlaneseq
    %v319 = vshrl.u32 %v318, 7
    %v320 = vsub.s32 %v317, %v319
    %v321 = vrot.slane %v313, %v320
    %v323 = vunpack.c.l.s4 1934713408
    %v324 = vunpack.c.0.s8 %v323
    %v325 = vlaneseq
    %v326 = vshrl.u32 %v325, 7
    %v327 = vsub.s32 %v324, %v326
    %v328 = vrot.slane %v314, %v327
    %v329 = vcombine.low %v273, %v305
    %v330 = vcombine.high %v273, %v305
    %v331 = vcombine.low %v280, %v312
    %v332 = vcombine.high %v280, %v312
    %v333 = vcombine.low %v289, %v321
    %v334 = vcombine.high %v289, %v321
    %v335 = vcombine.low %v296, %v328
    %v336 = vcombine.high %v296, %v328
    %v337 = vsub.f32 %v329, %v97
    %v338 = vsub.f32 %v330, %v97
    %v339 = vsub.f32 %v331, %v97
    %v340 = vsub.f32 %v332, %v97
    %v341 = vsub.f32 %v333, %v97
    %v342 = vsub.f32 %v334, %v97
    %v343 = vsub.f32 %v335, %v97
    %v344 = vsub.f32 %v336, %v97
    %v345 = vcombine.high %v93, %v93
    %v347 = vunpack.c.l.s4 1966171168
    %v348 = vunpack.c.0.s8 %v347
    %v349 = vlaneseq
    %v350 = vshrl.u32 %v349, 7
    %v351 = vsub.s32 %v348, %v350
    %v352 = vrot.slane %v93, %v351
    %v354 = vunpack.c.l.s4 1966171168
    %v355 = vunpack.c.0.s8 %v354
    %v356 = vlaneseq
    %v357 = vshrl.u32 %v356, 7
    %v358 = vsub.s32 %v355, %v357
    %v359 = vrot.slane %v345, %v358
    %v360 = vcombine.high %v352, %v352
    %v361 = vcombine.high %v359, %v359
    %v363 = vunpack.c.l.s4 1966171168
    %v364 = vunpack.c.0.s8 %v363
    %v365 = vlaneseq
    %v366 = vshrl.u32 %v365, 7
    %v367 = vsub.s32 %v364, %v366
    %v368 = vrot.slane %v352, %v367
    %v370 = vunpack.c.l.s4 1966171168
    %v371 = vunpack.c.0.s8 %v370
    %v372 = vlaneseq
    %v373 = vshrl.u32 %v372, 7
    %v374 = vsub.s32 %v371, %v373
    %v375 = vrot.slane %v359, %v374
    %v377 = vunpack.c.l.s4 1966171168
    %v378 = vunpack.c.0.s8 %v377
    %v379 = vlaneseq
    %v380 = vshrl.u32 %v379, 7
    %v381 = vsub.s32 %v378, %v380
    %v382 = vrot.slane %v360, %v381
    %v384 = vunpack.c.l.s4 1966171168
    %v385 = vunpack.c.0.s8 %v384
    %v386 = vlaneseq
    %v387 = vshrl.u32 %v386, 7
    %v388 = vsub.s32 %v385, %v387
    %v389 = vrot.slane %v361, %v388
    %v390 = vcombine.high %v368, %v368
    %v391 = vcombine.high %v375, %v375
    %v392 = vcombine.high %v382, %v382
    %v393 = vcombine.high %v389, %v389
    %v394 = vlaneseq
    %v395 = vshrl.u32 %v394, 7
    %v396 = vsub.s32 0, %v395
    %v397 = vrot.slane %v368, %v396
    %v398 = vlaneseq
    %v399 = vshrl.u32 %v398, 7
    %v400 = vsub.s32 0, %v399
    %v401 = vrot.slane %v382, %v400
    %v402 = vlaneseq
    %v403 = vshrl.u32 %v402, 7
    %v404 = vsub.s32 0, %v403
    %v405 = vrot.slane %v390, %v404
    %v406 = vlaneseq
    %v407 = vshrl.u32 %v406, 7
    %v408 = vsub.s32 0, %v407
    %v409 = vrot.slane %v392, %v408
    %v410 = vlaneseq
    %v411 = vshrl.u32 %v410, 7
    %v412 = vsub.s32 0, %v411
    %v413 = vrot.slane %v375, %v412
    %v414 = vlaneseq
    %v415 = vshrl.u32 %v414, 7
    %v416 = vsub.s32 0, %v415
    %v417 = vrot.slane %v389, %v416
    %v418 = vlaneseq
    %v419 = vshrl.u32 %v418, 7
    %v420 = vsub.s32 0, %v419
    %v421 = vrot.slane %v391, %v420
    %v422 = vlaneseq
    %v423 = vshrl.u32 %v422, 7
    %v424 = vsub.s32 0, %v423
    %v425 = vrot.slane %v393, %v424
    %v434 = vsub.f32 %v397, %v96
    %v435 = vsub.f32 %v401, %v96
    %v436 = vsub.f32 %v405, %v96
    %v437 = vsub.f32 %v409, %v96
    %v438 = vsub.f32 %v413, %v96
    %v439 = vsub.f32 %v417, %v96
    %v440 = vsub.f32 %v421, %v96
    %v441 = vsub.f32 %v425, %v96
    %v442 = vmul.f32 %v434, %v337
    %v443 = vmul.f32 %v435, %v338
    %v444 = vmul.f32 %v436, %v339
    %v445 = vmul.f32 %v437, %v340
    %v446 = vmul.f32 %v438, %v341
    %v447 = vmul.f32 %v439, %v342
    %v448 = vmul.f32 %v440, %v343
    %v449 = vmul.f32 %v441, %v344
    %v450 = vsel %vm106, %v442, 0.0
    %451 = vadd.xlane.f32.xlu0 %v450
    %v452 = vpop.xlane.xlu0 %451
    %v453 = vsel %vm106, %v443, 0.0
    %454 = vadd.xlane.f32.xlu0 %v453
    %v455 = vpop.xlane.xlu0 %454
    %v456 = vsel %vm106, %v444, 0.0
    %457 = vadd.xlane.f32.xlu0 %v456
    %v458 = vpop.xlane.xlu0 %457
    %v459 = vsel %vm106, %v445, 0.0
    %460 = vadd.xlane.f32.xlu0 %v459
    %v461 = vpop.xlane.xlu0 %460
    %v462 = vsel %vm106, %v446, 0.0
    %463 = vadd.xlane.f32.xlu0 %v462
    %v464 = vpop.xlane.xlu0 %463
    %v465 = vsel %vm106, %v447, 0.0
    %466 = vadd.xlane.f32.xlu0 %v465
    %v467 = vpop.xlane.xlu0 %466
    %v468 = vsel %vm106, %v448, 0.0
    %469 = vadd.xlane.f32.xlu0 %v468
    %v470 = vpop.xlane.xlu0 %469
    %v471 = vsel %vm106, %v449, 0.0
    %472 = vadd.xlane.f32.xlu0 %v471
    %v473 = vpop.xlane.xlu0 %472
    %v474 = vmul.f32 %v452, 0.5
    %v475 = vmul.f32 %v455, 0.5
    %v476 = vmul.f32 %v458, 0.5
    %v477 = vmul.f32 %v461, 0.5
    %v478 = vmul.f32 %v464, 0.5
    %v479 = vmul.f32 %v467, 0.5
    %v480 = vmul.f32 %v470, 0.5
    %v481 = vmul.f32 %v473, 0.5
    %v483 = vlaneseq
    %v484 = vshrl.u32 %v483, 7
    %v485 = vsub.s32 0, %v484
    %v486 = vrot.slane %v95, %v485
    %v496 = vlaneseq
    %v497 = vand.u32 %v496, 127
    %v498 = vlaneseq
    %v499 = vshrl.u32 %v498, 7
    %v500 = vsub.s32 %v497, %v499
    %v501 = vrot.slane %v474, %v500
    %v502 = vlaneseq
    %v503 = vshrl.u32 %v502, 7
    %v504 = vsub.s32 %v497, %v503
    %v505 = vrot.slane %v475, %v504
    %v506 = vlaneseq
    %v507 = vshrl.u32 %v506, 7
    %v508 = vsub.s32 %v497, %v507
    %v509 = vrot.slane %v476, %v508
    %v510 = vlaneseq
    %v511 = vshrl.u32 %v510, 7
    %v512 = vsub.s32 %v497, %v511
    %v513 = vrot.slane %v477, %v512
    %v514 = vlaneseq
    %v515 = vshrl.u32 %v514, 7
    %v516 = vsub.s32 %v497, %v515
    %v517 = vrot.slane %v478, %v516
    %v518 = vlaneseq
    %v519 = vshrl.u32 %v518, 7
    %v520 = vsub.s32 %v497, %v519
    %v521 = vrot.slane %v479, %v520
    %v522 = vlaneseq
    %v523 = vshrl.u32 %v522, 7
    %v524 = vsub.s32 %v497, %v523
    %v525 = vrot.slane %v480, %v524
    %v526 = vlaneseq
    %v527 = vshrl.u32 %v526, 7
    %v528 = vsub.s32 %v497, %v527
    %v529 = vrot.slane %v481, %v528
    %vm530 = vcmask 1041409
    %v531 = vsel %vm530, %v505, %v501
    %vm532 = vcmask 1042434
    %v533 = vsel %vm532, %v509, %v531
    %vm534 = vcmask 1043459
    %v535 = vsel %vm534, %v513, %v533
    %vm536 = vcmask 1044484
    %v537 = vsel %vm536, %v517, %v535
    %vm538 = vcmask 1045509
    %v539 = vsel %vm538, %v521, %v537
    %vm540 = vcmask 1046534
    %v541 = vsel %vm540, %v525, %v539
    %vm542 = vcmask 1047559
    %v543 = vsel %vm542, %v529, %v541
    %v545 = vsub.f32 %v486, %v543
    %vm546 = vcmask 64512
    %v547 = vsel %vm546, %v545, -inf
    %548 = vmax.xlane.f32.xlu0 %v547
    %v549 = vpop.xlane.xlu0 %548
    %v550 = vsub.f32 %v545, %v549
    %v551 = vmul.f32 %v550, 1.442695
    %v552 = vpow.pop %v551
    %v553 = vsel %vm546, %v552, 0.0
    %554 = vadd.xlane.f32.xlu0 %v553
    %v555 = vpop.xlane.xlu0 %554
    %v556 = vlaneseq
    %v557 = vshrl.u32 %v556, 7
    %v558 = vsub.s32 0, %v557
    %v559 = vrot.slane %v552, %v558
    %561 = vbcast.lane.b32.xlu0 %v559, 256
    %v562 = vpop.permute.xlu0 %561
    %v563 = vlaneseq
    %v564 = vshrl.u32 %v563, 7
    %v565 = vsub.s32 1, %v564
    %v566 = vrot.slane %v552, %v565
    %568 = vbcast.lane.b32.xlu0 %v566, 256
    %v569 = vpop.permute.xlu0 %568
    %v570 = vlaneseq
    %v571 = vshrl.u32 %v570, 7
    %v572 = vsub.s32 2, %v571
    %v573 = vrot.slane %v552, %v572
    %575 = vbcast.lane.b32.xlu0 %v573, 256
    %v576 = vpop.permute.xlu0 %575
    %v577 = vlaneseq
    %v578 = vshrl.u32 %v577, 7
    %v579 = vsub.s32 3, %v578
    %v580 = vrot.slane %v552, %v579
    %582 = vbcast.lane.b32.xlu0 %v580, 256
    %v583 = vpop.permute.xlu0 %582
    %v584 = vlaneseq
    %v585 = vshrl.u32 %v584, 7
    %v586 = vsub.s32 4, %v585
    %v587 = vrot.slane %v552, %v586
    %589 = vbcast.lane.b32.xlu0 %v587, 256
    %v590 = vpop.permute.xlu0 %589
    %v591 = vlaneseq
    %v592 = vshrl.u32 %v591, 7
    %v593 = vsub.s32 5, %v592
    %v594 = vrot.slane %v552, %v593
    %596 = vbcast.lane.b32.xlu0 %v594, 256
    %v597 = vpop.permute.xlu0 %596
    %v598 = vlaneseq
    %v599 = vshrl.u32 %v598, 7
    %v600 = vsub.s32 6, %v599
    %v601 = vrot.slane %v552, %v600
    %603 = vbcast.lane.b32.xlu0 %v601, 256
    %v604 = vpop.permute.xlu0 %603
    %v605 = vlaneseq
    %v606 = vshrl.u32 %v605, 7
    %v607 = vsub.s32 7, %v606
    %v608 = vrot.slane %v552, %v607
    %610 = vbcast.lane.b32.xlu0 %v608, 256
    %v611 = vpop.permute.xlu0 %610
    %v612 = vmul.f32 %v562, %v337
    %v613 = vmul.f32 %v569, %v338
    %v614 = vmul.f32 %v576, %v339
    %v615 = vmul.f32 %v583, %v340
    %v616 = vmul.f32 %v590, %v341
    %v617 = vmul.f32 %v597, %v342
    %v618 = vmul.f32 %v604, %v343
    %v619 = vmul.f32 %v611, %v344
    %v620 = vsel %vm106, %v612, 0.0
    %v621 = vrot.slane %v620, 4
    %v622 = vadd.f32 %v620, %v621
    %v623 = vrot.slane %v622, 2
    %v624 = vadd.f32 %v622, %v623
    %v625 = vrot.slane %v624, 1
    %v626 = vadd.f32 %v624, %v625
    %v627 = vsel %vm106, %v613, 0.0
    %v628 = vrot.slane %v627, 4
    %v629 = vadd.f32 %v627, %v628
    %v630 = vrot.slane %v629, 2
    %v631 = vadd.f32 %v629, %v630
    %v632 = vrot.slane %v631, 1
    %v633 = vadd.f32 %v631, %v632
    %v634 = vsel %vm106, %v614, 0.0
    %v635 = vrot.slane %v634, 4
    %v636 = vadd.f32 %v634, %v635
    %v637 = vrot.slane %v636, 2
    %v638 = vadd.f32 %v636, %v637
    %v639 = vrot.slane %v638, 1
    %v640 = vadd.f32 %v638, %v639
    %v641 = vsel %vm106, %v615, 0.0
    %v642 = vrot.slane %v641, 4
    %v643 = vadd.f32 %v641, %v642
    %v644 = vrot.slane %v643, 2
    %v645 = vadd.f32 %v643, %v644
    %v646 = vrot.slane %v645, 1
    %v647 = vadd.f32 %v645, %v646
    %v648 = vsel %vm106, %v616, 0.0
    %v649 = vrot.slane %v648, 4
    %v650 = vadd.f32 %v648, %v649
    %v651 = vrot.slane %v650, 2
    %v652 = vadd.f32 %v650, %v651
    %v653 = vrot.slane %v652, 1
    %v654 = vadd.f32 %v652, %v653
    %v655 = vsel %vm106, %v617, 0.0
    %v656 = vrot.slane %v655, 4
    %v657 = vadd.f32 %v655, %v656
    %v658 = vrot.slane %v657, 2
    %v659 = vadd.f32 %v657, %v658
    %v660 = vrot.slane %v659, 1
    %v661 = vadd.f32 %v659, %v660
    %v662 = vsel %vm106, %v618, 0.0
    %v663 = vrot.slane %v662, 4
    %v664 = vadd.f32 %v662, %v663
    %v665 = vrot.slane %v664, 2
    %v666 = vadd.f32 %v664, %v665
    %v667 = vrot.slane %v666, 1
    %v668 = vadd.f32 %v666, %v667
    %v669 = vsel %vm106, %v619, 0.0
    %v670 = vrot.slane %v669, 4
    %v671 = vadd.f32 %v669, %v670
    %v672 = vrot.slane %v671, 2
    %v673 = vadd.f32 %v671, %v672
    %v674 = vrot.slane %v673, 1
    %v675 = vadd.f32 %v673, %v674
    %v676 = vsub.f32 0.0, %v626
    %v677 = vsub.f32 0.0, %v633
    %v678 = vsub.f32 0.0, %v640
    %v679 = vsub.f32 0.0, %v647
    %v680 = vsub.f32 0.0, %v654
    %v681 = vsub.f32 0.0, %v661
    %v682 = vsub.f32 0.0, %v668
    %v683 = vsub.f32 0.0, %v675
    %v684 = vrcp.pop %v555
    %v686 = vrot.slane %v684, 1
    %v687 = vrot.slane %v684, 2
    %v688 = vrot.slane %v684, 3
    %v689 = vrot.slane %v684, 4
    %v690 = vrot.slane %v684, 5
    %v691 = vrot.slane %v684, 6
    %v692 = vrot.slane %v684, 7
    %v701 = vmul.f32 %v676, %v684
    %v702 = vmul.f32 %v677, %v686
    %v703 = vmul.f32 %v678, %v687
    %v704 = vmul.f32 %v679, %v688
    %v705 = vmul.f32 %v680, %v689
    %v706 = vmul.f32 %v681, %v690
    %v707 = vmul.f32 %v682, %v691
    %v708 = vmul.f32 %v683, %v692
    %v709 = vstv %s94
    %v710 = vmul.f32 %v709, %v701
    %v711 = vmul.f32 %v709, %v702
    %v712 = vmul.f32 %v709, %v703
    %v713 = vmul.f32 %v709, %v704
    %v714 = vmul.f32 %v709, %v705
    %v715 = vmul.f32 %v709, %v706
    %v716 = vmul.f32 %v709, %v707
    %v717 = vmul.f32 %v709, %v708
    %v726 = vrot.slane %v711, 7
    %v727 = vsel %vm530, %v726, %v710
    %v728 = vrot.slane %v712, 6
    %v729 = vsel %vm532, %v728, %v727
    %v730 = vrot.slane %v713, 5
    %v731 = vsel %vm534, %v730, %v729
    %v732 = vrot.slane %v714, 4
    %v733 = vsel %vm536, %v732, %v731
    %v734 = vrot.slane %v715, 3
    %v735 = vsel %vm538, %v734, %v733
    %v736 = vrot.slane %v716, 2
    %v737 = vsel %vm540, %v736, %v735
    %v738 = vrot.slane %v717, 1
    %v739 = vsel %vm542, %v738, %v737
    %v741 = vadd.f32 %v93, %v739
    %v743 = vsel %vm106, %v741, 0
    %745 = vmatprep.subr.mxu0 0.0
    %746 = vmatpush1.msra.mxu0 0.0
    %747 = vmatprep.subr.mxu0 0.0
    %748 = vmatpush1.msra.mxu0 0.0
    %749 = vmatprep.subr.mxu0 0.0
    %750 = vmatpush1.msra.mxu0 0.0
    %751 = vmatprep.subr.mxu0 0.0
    %752 = vmatpush1.msra.mxu0 0.0
    %753 = vmatprep.subr.mxu0 0.0
    %754 = vmatpush1.msra.mxu0 0.0
    %755 = vmatprep.subr.mxu0 0.0
    %756 = vmatpush1.msra.mxu0 0.0
    %757 = vmatprep.subr.mxu0 0.0
    %758 = vmatpush1.msra.mxu0 0.0
    %759 = vmatprep.subr.mxu0 0.0
    %760 = vmatpush1.msra.mxu0 0.0
    %761 = vmatprep.subr.mxu0 0.0
    %762 = vmatpush1.msra.mxu0 0.0
    %763 = vmatprep.subr.mxu0 0.0
    %764 = vmatpush1.msra.mxu0 0.0
    %765 = vmatprep.subr.mxu0 0.0
    %766 = vmatpush1.msra.mxu0 0.0
    %767 = vmatprep.subr.mxu0 0.0
    %768 = vmatpush1.msra.mxu0 0.0
    %769 = vmatprep.subr.mxu0 %v105
    %770 = vmatpush1.msra.mxu0 %v104
    %771 = vmatprep.subr.mxu0 %v103
    %772 = vmatpush1.msra.mxu0 %v102
    %773 = vmatprep.subr.mxu0 %v101
    %774 = vmatpush1.msra.mxu0 %v100
    %775 = vmatprep.subr.mxu0 %v99
    %776 = vmatpush1.msra.mxu0 %v98
    %777 = vmatprep.subr.mxu0 0.0
    %778 = vmatpush2.msra.mxu0 0.0
    %779 = vmatprep.subr.mxu0 0.0
    %780 = vmatpush2.msra.mxu0 0.0
    %781 = vmatprep.subr.mxu0 0.0
    %782 = vmatpush2.msra.mxu0 0.0
    %783 = vmatprep.subr.mxu0 0.0
    %784 = vmatpush2.msra.mxu0 0.0
    %785 = vmatprep.subr.mxu0 0.0
    %786 = vmatpush2.msra.mxu0 0.0
    %787 = vmatprep.subr.mxu0 0.0
    %788 = vmatpush2.msra.mxu0 0.0
    %789 = vmatprep.subr.mxu0 0.0
    %790 = vmatpush2.msra.mxu0 0.0
    %791 = vmatprep.subr.mxu0 0.0
    %792 = vmatpush2.msra.mxu0 0.0
    %793 = vmatprep.subr.mxu0 0.0
    %794 = vmatpush2.msra.mxu0 0.0
    %795 = vmatprep.subr.mxu0 0.0
    %796 = vmatpush2.msra.mxu0 0.0
    %797 = vmatprep.subr.mxu0 0.0
    %798 = vmatpush2.msra.mxu0 0.0
    %799 = vmatprep.subr.mxu0 0.0
    %800 = vmatpush2.msra.mxu0 0.0
    %801 = vmatprep.subr.mxu0 0.0
    %802 = vmatpush2.msra.mxu0 0.0
    %803 = vmatprep.subr.mxu0 0.0
    %804 = vmatpush2.msra.mxu0 0.0
    %805 = vmatprep.subr.mxu0 0.0
    %806 = vmatpush2.msra.mxu0 0.0
    %807 = vmatprep.subr.mxu0 0.0
    %808 = vmatpush2.msra.mxu0 0.0
    %809 = vmatprep.mubr.f32.mxu0 0.0
    %810 = vmatmul.mubr.f32.gmra.mxu0 %v743
    %v811 = vpop.f32.mrf.mxu0
    %v812 = vadd.f32 0.0, %v811
    %v813 = vpop.f32.mrf.mxu0
    %v814 = vadd.f32 0.0, %v813
    %815 = vdwg.mxu0
    %817 = vrot.lane.b32.xlu0 %v812, 96
    %v818 = vpop.permute.xlu0 %817
    %820 = vrot.lane.b32.xlu0 %v812, 64
    %v821 = vpop.permute.xlu0 %820
    %823 = vrot.lane.b32.xlu0 %v812, 32
    %v824 = vpop.permute.xlu0 %823
    %827 = vrot.lane.b32.xlu0 %v814, 96
    %v828 = vpop.permute.xlu0 %827
    %830 = vrot.lane.b32.xlu0 %v814, 64
    %v831 = vpop.permute.xlu0 %830
    %833 = vrot.lane.b32.xlu0 %v814, 32
    %v834 = vpop.permute.xlu0 %833
    %v836 = vcombine.low %v812, %v821
    %v837 = vcombine.high %v812, %v821
    %v839 = vunpack.c.l.s4 1983009808
    %v840 = vunpack.c.0.s8 %v839
    %v841 = vlaneseq
    %v842 = vshrl.u32 %v841, 7
    %v843 = vsub.s32 %v840, %v842
    %v844 = vrot.slane %v836, %v843
    %v846 = vunpack.c.l.s4 1983009808
    %v847 = vunpack.c.0.s8 %v846
    %v848 = vlaneseq
    %v849 = vshrl.u32 %v848, 7
    %v850 = vsub.s32 %v847, %v849
    %v851 = vrot.slane %v837, %v850
    %v852 = vcombine.low %v818, %v824
    %v853 = vcombine.high %v818, %v824
    %v855 = vunpack.c.l.s4 1983009808
    %v856 = vunpack.c.0.s8 %v855
    %v857 = vlaneseq
    %v858 = vshrl.u32 %v857, 7
    %v859 = vsub.s32 %v856, %v858
    %v860 = vrot.slane %v852, %v859
    %v862 = vunpack.c.l.s4 1983009808
    %v863 = vunpack.c.0.s8 %v862
    %v864 = vlaneseq
    %v865 = vshrl.u32 %v864, 7
    %v866 = vsub.s32 %v863, %v865
    %v867 = vrot.slane %v853, %v866
    %v868 = vcombine.low %v814, %v831
    %v869 = vcombine.high %v814, %v831
    %v871 = vunpack.c.l.s4 1983009808
    %v872 = vunpack.c.0.s8 %v871
    %v873 = vlaneseq
    %v874 = vshrl.u32 %v873, 7
    %v875 = vsub.s32 %v872, %v874
    %v876 = vrot.slane %v868, %v875
    %v878 = vunpack.c.l.s4 1983009808
    %v879 = vunpack.c.0.s8 %v878
    %v880 = vlaneseq
    %v881 = vshrl.u32 %v880, 7
    %v882 = vsub.s32 %v879, %v881
    %v883 = vrot.slane %v869, %v882
    %v884 = vcombine.low %v828, %v834
    %v885 = vcombine.high %v828, %v834
    %v887 = vunpack.c.l.s4 1983009808
    %v888 = vunpack.c.0.s8 %v887
    %v889 = vlaneseq
    %v890 = vshrl.u32 %v889, 7
    %v891 = vsub.s32 %v888, %v890
    %v892 = vrot.slane %v884, %v891
    %v894 = vunpack.c.l.s4 1983009808
    %v895 = vunpack.c.0.s8 %v894
    %v896 = vlaneseq
    %v897 = vshrl.u32 %v896, 7
    %v898 = vsub.s32 %v895, %v897
    %v899 = vrot.slane %v885, %v898
    %v900 = vcombine.low %v844, %v860
    %v901 = vcombine.high %v844, %v860
    %v903 = vunpack.c.l.s4 1934713408
    %v904 = vunpack.c.0.s8 %v903
    %v905 = vlaneseq
    %v906 = vshrl.u32 %v905, 7
    %v907 = vsub.s32 %v904, %v906
    %v908 = vrot.slane %v900, %v907
    %v910 = vunpack.c.l.s4 1934713408
    %v911 = vunpack.c.0.s8 %v910
    %v912 = vlaneseq
    %v913 = vshrl.u32 %v912, 7
    %v914 = vsub.s32 %v911, %v913
    %v915 = vrot.slane %v901, %v914
    %v916 = vcombine.low %v851, %v867
    %v917 = vcombine.high %v851, %v867
    %v919 = vunpack.c.l.s4 1934713408
    %v920 = vunpack.c.0.s8 %v919
    %v921 = vlaneseq
    %v922 = vshrl.u32 %v921, 7
    %v923 = vsub.s32 %v920, %v922
    %v924 = vrot.slane %v916, %v923
    %v926 = vunpack.c.l.s4 1934713408
    %v927 = vunpack.c.0.s8 %v926
    %v928 = vlaneseq
    %v929 = vshrl.u32 %v928, 7
    %v930 = vsub.s32 %v927, %v929
    %v931 = vrot.slane %v917, %v930
    %v932 = vcombine.low %v876, %v892
    %v933 = vcombine.high %v876, %v892
    %v935 = vunpack.c.l.s4 1934713408
    %v936 = vunpack.c.0.s8 %v935
    %v937 = vlaneseq
    %v938 = vshrl.u32 %v937, 7
    %v939 = vsub.s32 %v936, %v938
    %v940 = vrot.slane %v932, %v939
    %v942 = vunpack.c.l.s4 1934713408
    %v943 = vunpack.c.0.s8 %v942
    %v944 = vlaneseq
    %v945 = vshrl.u32 %v944, 7
    %v946 = vsub.s32 %v943, %v945
    %v947 = vrot.slane %v933, %v946
    %v948 = vcombine.low %v883, %v899
    %v949 = vcombine.high %v883, %v899
    %v951 = vunpack.c.l.s4 1934713408
    %v952 = vunpack.c.0.s8 %v951
    %v953 = vlaneseq
    %v954 = vshrl.u32 %v953, 7
    %v955 = vsub.s32 %v952, %v954
    %v956 = vrot.slane %v948, %v955
    %v958 = vunpack.c.l.s4 1934713408
    %v959 = vunpack.c.0.s8 %v958
    %v960 = vlaneseq
    %v961 = vshrl.u32 %v960, 7
    %v962 = vsub.s32 %v959, %v961
    %v963 = vrot.slane %v949, %v962
    %v964 = vcombine.low %v908, %v940
    %v965 = vcombine.high %v908, %v940
    %v966 = vcombine.low %v915, %v947
    %v967 = vcombine.high %v915, %v947
    %v968 = vcombine.low %v924, %v956
    %v969 = vcombine.high %v924, %v956
    %v970 = vcombine.low %v931, %v963
    %v971 = vcombine.high %v931, %v963
    %v972 = vsub.f32 %v964, %v97
    %v973 = vsub.f32 %v965, %v97
    %v974 = vsub.f32 %v966, %v97
    %v975 = vsub.f32 %v967, %v97
    %v976 = vsub.f32 %v968, %v97
    %v977 = vsub.f32 %v969, %v97
    %v978 = vsub.f32 %v970, %v97
    %v979 = vsub.f32 %v971, %v97
    %v980 = vcombine.high %v741, %v741
    %v982 = vunpack.c.l.s4 1966171168
    %v983 = vunpack.c.0.s8 %v982
    %v984 = vlaneseq
    %v985 = vshrl.u32 %v984, 7
    %v986 = vsub.s32 %v983, %v985
    %v987 = vrot.slane %v741, %v986
    %v989 = vunpack.c.l.s4 1966171168
    %v990 = vunpack.c.0.s8 %v989
    %v991 = vlaneseq
    %v992 = vshrl.u32 %v991, 7
    %v993 = vsub.s32 %v990, %v992
    %v994 = vrot.slane %v980, %v993
    %v995 = vcombine.high %v987, %v987
    %v996 = vcombine.high %v994, %v994
    %v998 = vunpack.c.l.s4 1966171168
    %v999 = vunpack.c.0.s8 %v998
    %v1000 = vlaneseq
    %v1001 = vshrl.u32 %v1000, 7
    %v1002 = vsub.s32 %v999, %v1001
    %v1003 = vrot.slane %v987, %v1002
    %v1005 = vunpack.c.l.s4 1966171168
    %v1006 = vunpack.c.0.s8 %v1005
    %v1007 = vlaneseq
    %v1008 = vshrl.u32 %v1007, 7
    %v1009 = vsub.s32 %v1006, %v1008
    %v1010 = vrot.slane %v994, %v1009
    %v1012 = vunpack.c.l.s4 1966171168
    %v1013 = vunpack.c.0.s8 %v1012
    %v1014 = vlaneseq
    %v1015 = vshrl.u32 %v1014, 7
    %v1016 = vsub.s32 %v1013, %v1015
    %v1017 = vrot.slane %v995, %v1016
    %v1019 = vunpack.c.l.s4 1966171168
    %v1020 = vunpack.c.0.s8 %v1019
    %v1021 = vlaneseq
    %v1022 = vshrl.u32 %v1021, 7
    %v1023 = vsub.s32 %v1020, %v1022
    %v1024 = vrot.slane %v996, %v1023
    %v1025 = vcombine.high %v1003, %v1003
    %v1026 = vcombine.high %v1010, %v1010
    %v1027 = vcombine.high %v1017, %v1017
    %v1028 = vcombine.high %v1024, %v1024
    %v1029 = vlaneseq
    %v1030 = vshrl.u32 %v1029, 7
    %v1031 = vsub.s32 0, %v1030
    %v1032 = vrot.slane %v1003, %v1031
    %v1033 = vlaneseq
    %v1034 = vshrl.u32 %v1033, 7
    %v1035 = vsub.s32 0, %v1034
    %v1036 = vrot.slane %v1017, %v1035
    %v1037 = vlaneseq
    %v1038 = vshrl.u32 %v1037, 7
    %v1039 = vsub.s32 0, %v1038
    %v1040 = vrot.slane %v1025, %v1039
    %v1041 = vlaneseq
    %v1042 = vshrl.u32 %v1041, 7
    %v1043 = vsub.s32 0, %v1042
    %v1044 = vrot.slane %v1027, %v1043
    %v1045 = vlaneseq
    %v1046 = vshrl.u32 %v1045, 7
    %v1047 = vsub.s32 0, %v1046
    %v1048 = vrot.slane %v1010, %v1047
    %v1049 = vlaneseq
    %v1050 = vshrl.u32 %v1049, 7
    %v1051 = vsub.s32 0, %v1050
    %v1052 = vrot.slane %v1024, %v1051
    %v1053 = vlaneseq
    %v1054 = vshrl.u32 %v1053, 7
    %v1055 = vsub.s32 0, %v1054
    %v1056 = vrot.slane %v1026, %v1055
    %v1057 = vlaneseq
    %v1058 = vshrl.u32 %v1057, 7
    %v1059 = vsub.s32 0, %v1058
    %v1060 = vrot.slane %v1028, %v1059
    %v1069 = vsub.f32 %v1032, %v96
    %v1070 = vsub.f32 %v1036, %v96
    %v1071 = vsub.f32 %v1040, %v96
    %v1072 = vsub.f32 %v1044, %v96
    %v1073 = vsub.f32 %v1048, %v96
    %v1074 = vsub.f32 %v1052, %v96
    %v1075 = vsub.f32 %v1056, %v96
    %v1076 = vsub.f32 %v1060, %v96
    %v1077 = vmul.f32 %v1069, %v972
    %v1078 = vmul.f32 %v1070, %v973
    %v1079 = vmul.f32 %v1071, %v974
    %v1080 = vmul.f32 %v1072, %v975
    %v1081 = vmul.f32 %v1073, %v976
    %v1082 = vmul.f32 %v1074, %v977
    %v1083 = vmul.f32 %v1075, %v978
    %v1084 = vmul.f32 %v1076, %v979
    %v1085 = vsel %vm106, %v1077, 0.0
    %1086 = vadd.xlane.f32.xlu0 %v1085
    %v1087 = vpop.xlane.xlu0 %1086
    %v1088 = vsel %vm106, %v1078, 0.0
    %1089 = vadd.xlane.f32.xlu0 %v1088
    %v1090 = vpop.xlane.xlu0 %1089
    %v1091 = vsel %vm106, %v1079, 0.0
    %1092 = vadd.xlane.f32.xlu0 %v1091
    %v1093 = vpop.xlane.xlu0 %1092
    %v1094 = vsel %vm106, %v1080, 0.0
    %1095 = vadd.xlane.f32.xlu0 %v1094
    %v1096 = vpop.xlane.xlu0 %1095
    %v1097 = vsel %vm106, %v1081, 0.0
    %1098 = vadd.xlane.f32.xlu0 %v1097
    %v1099 = vpop.xlane.xlu0 %1098
    %v1100 = vsel %vm106, %v1082, 0.0
    %1101 = vadd.xlane.f32.xlu0 %v1100
    %v1102 = vpop.xlane.xlu0 %1101
    %v1103 = vsel %vm106, %v1083, 0.0
    %1104 = vadd.xlane.f32.xlu0 %v1103
    %v1105 = vpop.xlane.xlu0 %1104
    %v1106 = vsel %vm106, %v1084, 0.0
    %1107 = vadd.xlane.f32.xlu0 %v1106
    %v1108 = vpop.xlane.xlu0 %1107
    %v1109 = vmul.f32 %v1087, 0.5
    %v1110 = vmul.f32 %v1090, 0.5
    %v1111 = vmul.f32 %v1093, 0.5
    %v1112 = vmul.f32 %v1096, 0.5
    %v1113 = vmul.f32 %v1099, 0.5
    %v1114 = vmul.f32 %v1102, 0.5
    %v1115 = vmul.f32 %v1105, 0.5
    %v1116 = vmul.f32 %v1108, 0.5
    %v1125 = vlaneseq
    %v1126 = vshrl.u32 %v1125, 7
    %v1127 = vsub.s32 %v497, %v1126
    %v1128 = vrot.slane %v1109, %v1127
    %v1129 = vlaneseq
    %v1130 = vshrl.u32 %v1129, 7
    %v1131 = vsub.s32 %v497, %v1130
    %v1132 = vrot.slane %v1110, %v1131
    %v1133 = vlaneseq
    %v1134 = vshrl.u32 %v1133, 7
    %v1135 = vsub.s32 %v497, %v1134
    %v1136 = vrot.slane %v1111, %v1135
    %v1137 = vlaneseq
    %v1138 = vshrl.u32 %v1137, 7
    %v1139 = vsub.s32 %v497, %v1138
    %v1140 = vrot.slane %v1112, %v1139
    %v1141 = vlaneseq
    %v1142 = vshrl.u32 %v1141, 7
    %v1143 = vsub.s32 %v497, %v1142
    %v1144 = vrot.slane %v1113, %v1143
    %v1145 = vlaneseq
    %v1146 = vshrl.u32 %v1145, 7
    %v1147 = vsub.s32 %v497, %v1146
    %v1148 = vrot.slane %v1114, %v1147
    %v1149 = vlaneseq
    %v1150 = vshrl.u32 %v1149, 7
    %v1151 = vsub.s32 %v497, %v1150
    %v1152 = vrot.slane %v1115, %v1151
    %v1153 = vlaneseq
    %v1154 = vshrl.u32 %v1153, 7
    %v1155 = vsub.s32 %v497, %v1154
    %v1156 = vrot.slane %v1116, %v1155
    %v1157 = vsel %vm530, %v1132, %v1128
    %v1158 = vsel %vm532, %v1136, %v1157
    %v1159 = vsel %vm534, %v1140, %v1158
    %v1160 = vsel %vm536, %v1144, %v1159
    %v1161 = vsel %vm538, %v1148, %v1160
    %v1162 = vsel %vm540, %v1152, %v1161
    %v1163 = vsel %vm542, %v1156, %v1162
    %v1165 = vsub.f32 %v486, %v1163
    %v1166 = vsel %vm546, %v1165, -inf
    %1167 = vmax.xlane.f32.xlu0 %v1166
    %v1168 = vpop.xlane.xlu0 %1167
    %v1169 = vsub.f32 %v1165, %v1168
    %v1170 = vmul.f32 %v1169, 1.442695
    %v1171 = vpow.pop %v1170
    %v1172 = vsel %vm546, %v1171, 0.0
    %1173 = vadd.xlane.f32.xlu0 %v1172
    %v1174 = vpop.xlane.xlu0 %1173
    %v1175 = vlaneseq
    %v1176 = vshrl.u32 %v1175, 7
    %v1177 = vsub.s32 0, %v1176
    %v1178 = vrot.slane %v1171, %v1177
    %1180 = vbcast.lane.b32.xlu0 %v1178, 256
    %v1181 = vpop.permute.xlu0 %1180
    %v1182 = vlaneseq
    %v1183 = vshrl.u32 %v1182, 7
    %v1184 = vsub.s32 1, %v1183
    %v1185 = vrot.slane %v1171, %v1184
    %1187 = vbcast.lane.b32.xlu0 %v1185, 256
    %v1188 = vpop.permute.xlu0 %1187
    %v1189 = vlaneseq
    %v1190 = vshrl.u32 %v1189, 7
    %v1191 = vsub.s32 2, %v1190
    %v1192 = vrot.slane %v1171, %v1191
    %1194 = vbcast.lane.b32.xlu0 %v1192, 256
    %v1195 = vpop.permute.xlu0 %1194
    %v1196 = vlaneseq
    %v1197 = vshrl.u32 %v1196, 7
    %v1198 = vsub.s32 3, %v1197
    %v1199 = vrot.slane %v1171, %v1198
    %1201 = vbcast.lane.b32.xlu0 %v1199, 256
    %v1202 = vpop.permute.xlu0 %1201
    %v1203 = vlaneseq
    %v1204 = vshrl.u32 %v1203, 7
    %v1205 = vsub.s32 4, %v1204
    %v1206 = vrot.slane %v1171, %v1205
    %1208 = vbcast.lane.b32.xlu0 %v1206, 256
    %v1209 = vpop.permute.xlu0 %1208
    %v1210 = vlaneseq
    %v1211 = vshrl.u32 %v1210, 7
    %v1212 = vsub.s32 5, %v1211
    %v1213 = vrot.slane %v1171, %v1212
    %1215 = vbcast.lane.b32.xlu0 %v1213, 256
    %v1216 = vpop.permute.xlu0 %1215
    %v1217 = vlaneseq
    %v1218 = vshrl.u32 %v1217, 7
    %v1219 = vsub.s32 6, %v1218
    %v1220 = vrot.slane %v1171, %v1219
    %1222 = vbcast.lane.b32.xlu0 %v1220, 256
    %v1223 = vpop.permute.xlu0 %1222
    %v1224 = vlaneseq
    %v1225 = vshrl.u32 %v1224, 7
    %v1226 = vsub.s32 7, %v1225
    %v1227 = vrot.slane %v1171, %v1226
    %1229 = vbcast.lane.b32.xlu0 %v1227, 256
    %v1230 = vpop.permute.xlu0 %1229
    %v1231 = vmul.f32 %v1181, %v972
    %v1232 = vmul.f32 %v1188, %v973
    %v1233 = vmul.f32 %v1195, %v974
    %v1234 = vmul.f32 %v1202, %v975
    %v1235 = vmul.f32 %v1209, %v976
    %v1236 = vmul.f32 %v1216, %v977
    %v1237 = vmul.f32 %v1223, %v978
    %v1238 = vmul.f32 %v1230, %v979
    %v1239 = vsel %vm106, %v1231, 0.0
    %v1240 = vrot.slane %v1239, 4
    %v1241 = vadd.f32 %v1239, %v1240
    %v1242 = vrot.slane %v1241, 2
    %v1243 = vadd.f32 %v1241, %v1242
    %v1244 = vrot.slane %v1243, 1
    %v1245 = vadd.f32 %v1243, %v1244
    %v1246 = vsel %vm106, %v1232, 0.0
    %v1247 = vrot.slane %v1246, 4
    %v1248 = vadd.f32 %v1246, %v1247
    %v1249 = vrot.slane %v1248, 2
    %v1250 = vadd.f32 %v1248, %v1249
    %v1251 = vrot.slane %v1250, 1
    %v1252 = vadd.f32 %v1250, %v1251
    %v1253 = vsel %vm106, %v1233, 0.0
    %v1254 = vrot.slane %v1253, 4
    %v1255 = vadd.f32 %v1253, %v1254
    %v1256 = vrot.slane %v1255, 2
    %v1257 = vadd.f32 %v1255, %v1256
    %v1258 = vrot.slane %v1257, 1
    %v1259 = vadd.f32 %v1257, %v1258
    %v1260 = vsel %vm106, %v1234, 0.0
    %v1261 = vrot.slane %v1260, 4
    %v1262 = vadd.f32 %v1260, %v1261
    %v1263 = vrot.slane %v1262, 2
    %v1264 = vadd.f32 %v1262, %v1263
    %v1265 = vrot.slane %v1264, 1
    %v1266 = vadd.f32 %v1264, %v1265
    %v1267 = vsel %vm106, %v1235, 0.0
    %v1268 = vrot.slane %v1267, 4
    %v1269 = vadd.f32 %v1267, %v1268
    %v1270 = vrot.slane %v1269, 2
    %v1271 = vadd.f32 %v1269, %v1270
    %v1272 = vrot.slane %v1271, 1
    %v1273 = vadd.f32 %v1271, %v1272
    %v1274 = vsel %vm106, %v1236, 0.0
    %v1275 = vrot.slane %v1274, 4
    %v1276 = vadd.f32 %v1274, %v1275
    %v1277 = vrot.slane %v1276, 2
    %v1278 = vadd.f32 %v1276, %v1277
    %v1279 = vrot.slane %v1278, 1
    %v1280 = vadd.f32 %v1278, %v1279
    %v1281 = vsel %vm106, %v1237, 0.0
    %v1282 = vrot.slane %v1281, 4
    %v1283 = vadd.f32 %v1281, %v1282
    %v1284 = vrot.slane %v1283, 2
    %v1285 = vadd.f32 %v1283, %v1284
    %v1286 = vrot.slane %v1285, 1
    %v1287 = vadd.f32 %v1285, %v1286
    %v1288 = vsel %vm106, %v1238, 0.0
    %v1289 = vrot.slane %v1288, 4
    %v1290 = vadd.f32 %v1288, %v1289
    %v1291 = vrot.slane %v1290, 2
    %v1292 = vadd.f32 %v1290, %v1291
    %v1293 = vrot.slane %v1292, 1
    %v1294 = vadd.f32 %v1292, %v1293
    %v1295 = vsub.f32 0.0, %v1245
    %v1296 = vsub.f32 0.0, %v1252
    %v1297 = vsub.f32 0.0, %v1259
    %v1298 = vsub.f32 0.0, %v1266
    %v1299 = vsub.f32 0.0, %v1273
    %v1300 = vsub.f32 0.0, %v1280
    %v1301 = vsub.f32 0.0, %v1287
    %v1302 = vsub.f32 0.0, %v1294
    %v1303 = vrcp.pop %v1174
    %v1305 = vrot.slane %v1303, 1
    %v1306 = vrot.slane %v1303, 2
    %v1307 = vrot.slane %v1303, 3
    %v1308 = vrot.slane %v1303, 4
    %v1309 = vrot.slane %v1303, 5
    %v1310 = vrot.slane %v1303, 6
    %v1311 = vrot.slane %v1303, 7
    %v1320 = vmul.f32 %v1295, %v1303
    %v1321 = vmul.f32 %v1296, %v1305
    %v1322 = vmul.f32 %v1297, %v1306
    %v1323 = vmul.f32 %v1298, %v1307
    %v1324 = vmul.f32 %v1299, %v1308
    %v1325 = vmul.f32 %v1300, %v1309
    %v1326 = vmul.f32 %v1301, %v1310
    %v1327 = vmul.f32 %v1302, %v1311
    %v1328 = vmul.f32 %v709, %v1320
    %v1329 = vmul.f32 %v709, %v1321
    %v1330 = vmul.f32 %v709, %v1322
    %v1331 = vmul.f32 %v709, %v1323
    %v1332 = vmul.f32 %v709, %v1324
    %v1333 = vmul.f32 %v709, %v1325
    %v1334 = vmul.f32 %v709, %v1326
    %v1335 = vmul.f32 %v709, %v1327
    %v1344 = vrot.slane %v1329, 7
    %v1345 = vsel %vm530, %v1344, %v1328
    %v1346 = vrot.slane %v1330, 6
    %v1347 = vsel %vm532, %v1346, %v1345
    %v1348 = vrot.slane %v1331, 5
    %v1349 = vsel %vm534, %v1348, %v1347
    %v1350 = vrot.slane %v1332, 4
    %v1351 = vsel %vm536, %v1350, %v1349
    %v1352 = vrot.slane %v1333, 3
    %v1353 = vsel %vm538, %v1352, %v1351
    %v1354 = vrot.slane %v1334, 2
    %v1355 = vsel %vm540, %v1354, %v1353
    %v1356 = vrot.slane %v1335, 1
    %v1357 = vsel %vm542, %v1356, %v1355
    %v1359 = vadd.f32 %v741, %v1357
    %v1361 = vsel %vm106, %v1359, 0
    %1363 = vmatprep.subr.mxu0 0.0
    %1364 = vmatpush1.msra.mxu0 0.0
    %1365 = vmatprep.subr.mxu0 0.0
    %1366 = vmatpush1.msra.mxu0 0.0
    %1367 = vmatprep.subr.mxu0 0.0
    %1368 = vmatpush1.msra.mxu0 0.0
    %1369 = vmatprep.subr.mxu0 0.0
    %1370 = vmatpush1.msra.mxu0 0.0
    %1371 = vmatprep.subr.mxu0 0.0
    %1372 = vmatpush1.msra.mxu0 0.0
    %1373 = vmatprep.subr.mxu0 0.0
    %1374 = vmatpush1.msra.mxu0 0.0
    %1375 = vmatprep.subr.mxu0 0.0
    %1376 = vmatpush1.msra.mxu0 0.0
    %1377 = vmatprep.subr.mxu0 0.0
    %1378 = vmatpush1.msra.mxu0 0.0
    %1379 = vmatprep.subr.mxu0 0.0
    %1380 = vmatpush1.msra.mxu0 0.0
    %1381 = vmatprep.subr.mxu0 0.0
    %1382 = vmatpush1.msra.mxu0 0.0
    %1383 = vmatprep.subr.mxu0 0.0
    %1384 = vmatpush1.msra.mxu0 0.0
    %1385 = vmatprep.subr.mxu0 0.0
    %1386 = vmatpush1.msra.mxu0 0.0
    %1387 = vmatprep.subr.mxu0 %v105
    %1388 = vmatpush1.msra.mxu0 %v104
    %1389 = vmatprep.subr.mxu0 %v103
    %1390 = vmatpush1.msra.mxu0 %v102
    %1391 = vmatprep.subr.mxu0 %v101
    %1392 = vmatpush1.msra.mxu0 %v100
    %1393 = vmatprep.subr.mxu0 %v99
    %1394 = vmatpush1.msra.mxu0 %v98
    %1395 = vmatprep.subr.mxu0 0.0
    %1396 = vmatpush2.msra.mxu0 0.0
    %1397 = vmatprep.subr.mxu0 0.0
    %1398 = vmatpush2.msra.mxu0 0.0
    %1399 = vmatprep.subr.mxu0 0.0
    %1400 = vmatpush2.msra.mxu0 0.0
    %1401 = vmatprep.subr.mxu0 0.0
    %1402 = vmatpush2.msra.mxu0 0.0
    %1403 = vmatprep.subr.mxu0 0.0
    %1404 = vmatpush2.msra.mxu0 0.0
    %1405 = vmatprep.subr.mxu0 0.0
    %1406 = vmatpush2.msra.mxu0 0.0
    %1407 = vmatprep.subr.mxu0 0.0
    %1408 = vmatpush2.msra.mxu0 0.0
    %1409 = vmatprep.subr.mxu0 0.0
    %1410 = vmatpush2.msra.mxu0 0.0
    %1411 = vmatprep.subr.mxu0 0.0
    %1412 = vmatpush2.msra.mxu0 0.0
    %1413 = vmatprep.subr.mxu0 0.0
    %1414 = vmatpush2.msra.mxu0 0.0
    %1415 = vmatprep.subr.mxu0 0.0
    %1416 = vmatpush2.msra.mxu0 0.0
    %1417 = vmatprep.subr.mxu0 0.0
    %1418 = vmatpush2.msra.mxu0 0.0
    %1419 = vmatprep.subr.mxu0 0.0
    %1420 = vmatpush2.msra.mxu0 0.0
    %1421 = vmatprep.subr.mxu0 0.0
    %1422 = vmatpush2.msra.mxu0 0.0
    %1423 = vmatprep.subr.mxu0 0.0
    %1424 = vmatpush2.msra.mxu0 0.0
    %1425 = vmatprep.subr.mxu0 0.0
    %1426 = vmatpush2.msra.mxu0 0.0
    %1427 = vmatprep.mubr.f32.mxu0 0.0
    %1428 = vmatmul.mubr.f32.gmra.mxu0 %v1361
    %v1429 = vpop.f32.mrf.mxu0
    %v1430 = vadd.f32 0.0, %v1429
    %v1431 = vpop.f32.mrf.mxu0
    %v1432 = vadd.f32 0.0, %v1431
    %1433 = vdwg.mxu0
    %1435 = vrot.lane.b32.xlu0 %v1430, 96
    %v1436 = vpop.permute.xlu0 %1435
    %1438 = vrot.lane.b32.xlu0 %v1430, 64
    %v1439 = vpop.permute.xlu0 %1438
    %1441 = vrot.lane.b32.xlu0 %v1430, 32
    %v1442 = vpop.permute.xlu0 %1441
    %1445 = vrot.lane.b32.xlu0 %v1432, 96
    %v1446 = vpop.permute.xlu0 %1445
    %1448 = vrot.lane.b32.xlu0 %v1432, 64
    %v1449 = vpop.permute.xlu0 %1448
    %1451 = vrot.lane.b32.xlu0 %v1432, 32
    %v1452 = vpop.permute.xlu0 %1451
    %v1454 = vcombine.low %v1430, %v1439
    %v1455 = vcombine.high %v1430, %v1439
    %v1457 = vunpack.c.l.s4 1983009808
    %v1458 = vunpack.c.0.s8 %v1457
    %v1459 = vlaneseq
    %v1460 = vshrl.u32 %v1459, 7
    %v1461 = vsub.s32 %v1458, %v1460
    %v1462 = vrot.slane %v1454, %v1461
    %v1464 = vunpack.c.l.s4 1983009808
    %v1465 = vunpack.c.0.s8 %v1464
    %v1466 = vlaneseq
    %v1467 = vshrl.u32 %v1466, 7
    %v1468 = vsub.s32 %v1465, %v1467
    %v1469 = vrot.slane %v1455, %v1468
    %v1470 = vcombine.low %v1436, %v1442
    %v1471 = vcombine.high %v1436, %v1442
    %v1473 = vunpack.c.l.s4 1983009808
    %v1474 = vunpack.c.0.s8 %v1473
    %v1475 = vlaneseq
    %v1476 = vshrl.u32 %v1475, 7
    %v1477 = vsub.s32 %v1474, %v1476
    %v1478 = vrot.slane %v1470, %v1477
    %v1480 = vunpack.c.l.s4 1983009808
    %v1481 = vunpack.c.0.s8 %v1480
    %v1482 = vlaneseq
    %v1483 = vshrl.u32 %v1482, 7
    %v1484 = vsub.s32 %v1481, %v1483
    %v1485 = vrot.slane %v1471, %v1484
    %v1486 = vcombine.low %v1432, %v1449
    %v1487 = vcombine.high %v1432, %v1449
    %v1489 = vunpack.c.l.s4 1983009808
    %v1490 = vunpack.c.0.s8 %v1489
    %v1491 = vlaneseq
    %v1492 = vshrl.u32 %v1491, 7
    %v1493 = vsub.s32 %v1490, %v1492
    %v1494 = vrot.slane %v1486, %v1493
    %v1496 = vunpack.c.l.s4 1983009808
    %v1497 = vunpack.c.0.s8 %v1496
    %v1498 = vlaneseq
    %v1499 = vshrl.u32 %v1498, 7
    %v1500 = vsub.s32 %v1497, %v1499
    %v1501 = vrot.slane %v1487, %v1500
    %v1502 = vcombine.low %v1446, %v1452
    %v1503 = vcombine.high %v1446, %v1452
    %v1505 = vunpack.c.l.s4 1983009808
    %v1506 = vunpack.c.0.s8 %v1505
    %v1507 = vlaneseq
    %v1508 = vshrl.u32 %v1507, 7
    %v1509 = vsub.s32 %v1506, %v1508
    %v1510 = vrot.slane %v1502, %v1509
    %v1512 = vunpack.c.l.s4 1983009808
    %v1513 = vunpack.c.0.s8 %v1512
    %v1514 = vlaneseq
    %v1515 = vshrl.u32 %v1514, 7
    %v1516 = vsub.s32 %v1513, %v1515
    %v1517 = vrot.slane %v1503, %v1516
    %v1518 = vcombine.low %v1462, %v1478
    %v1519 = vcombine.high %v1462, %v1478
    %v1521 = vunpack.c.l.s4 1934713408
    %v1522 = vunpack.c.0.s8 %v1521
    %v1523 = vlaneseq
    %v1524 = vshrl.u32 %v1523, 7
    %v1525 = vsub.s32 %v1522, %v1524
    %v1526 = vrot.slane %v1518, %v1525
    %v1528 = vunpack.c.l.s4 1934713408
    %v1529 = vunpack.c.0.s8 %v1528
    %v1530 = vlaneseq
    %v1531 = vshrl.u32 %v1530, 7
    %v1532 = vsub.s32 %v1529, %v1531
    %v1533 = vrot.slane %v1519, %v1532
    %v1534 = vcombine.low %v1469, %v1485
    %v1535 = vcombine.high %v1469, %v1485
    %v1537 = vunpack.c.l.s4 1934713408
    %v1538 = vunpack.c.0.s8 %v1537
    %v1539 = vlaneseq
    %v1540 = vshrl.u32 %v1539, 7
    %v1541 = vsub.s32 %v1538, %v1540
    %v1542 = vrot.slane %v1534, %v1541
    %v1544 = vunpack.c.l.s4 1934713408
    %v1545 = vunpack.c.0.s8 %v1544
    %v1546 = vlaneseq
    %v1547 = vshrl.u32 %v1546, 7
    %v1548 = vsub.s32 %v1545, %v1547
    %v1549 = vrot.slane %v1535, %v1548
    %v1550 = vcombine.low %v1494, %v1510
    %v1551 = vcombine.high %v1494, %v1510
    %v1553 = vunpack.c.l.s4 1934713408
    %v1554 = vunpack.c.0.s8 %v1553
    %v1555 = vlaneseq
    %v1556 = vshrl.u32 %v1555, 7
    %v1557 = vsub.s32 %v1554, %v1556
    %v1558 = vrot.slane %v1550, %v1557
    %v1560 = vunpack.c.l.s4 1934713408
    %v1561 = vunpack.c.0.s8 %v1560
    %v1562 = vlaneseq
    %v1563 = vshrl.u32 %v1562, 7
    %v1564 = vsub.s32 %v1561, %v1563
    %v1565 = vrot.slane %v1551, %v1564
    %v1566 = vcombine.low %v1501, %v1517
    %v1567 = vcombine.high %v1501, %v1517
    %v1569 = vunpack.c.l.s4 1934713408
    %v1570 = vunpack.c.0.s8 %v1569
    %v1571 = vlaneseq
    %v1572 = vshrl.u32 %v1571, 7
    %v1573 = vsub.s32 %v1570, %v1572
    %v1574 = vrot.slane %v1566, %v1573
    %v1576 = vunpack.c.l.s4 1934713408
    %v1577 = vunpack.c.0.s8 %v1576
    %v1578 = vlaneseq
    %v1579 = vshrl.u32 %v1578, 7
    %v1580 = vsub.s32 %v1577, %v1579
    %v1581 = vrot.slane %v1567, %v1580
    %v1582 = vcombine.low %v1526, %v1558
    %v1583 = vcombine.high %v1526, %v1558
    %v1584 = vcombine.low %v1533, %v1565
    %v1585 = vcombine.high %v1533, %v1565
    %v1586 = vcombine.low %v1542, %v1574
    %v1587 = vcombine.high %v1542, %v1574
    %v1588 = vcombine.low %v1549, %v1581
    %v1589 = vcombine.high %v1549, %v1581
    %v1590 = vsub.f32 %v1582, %v97
    %v1591 = vsub.f32 %v1583, %v97
    %v1592 = vsub.f32 %v1584, %v97
    %v1593 = vsub.f32 %v1585, %v97
    %v1594 = vsub.f32 %v1586, %v97
    %v1595 = vsub.f32 %v1587, %v97
    %v1596 = vsub.f32 %v1588, %v97
    %v1597 = vsub.f32 %v1589, %v97
    %v1598 = vcombine.high %v1359, %v1359
    %v1600 = vunpack.c.l.s4 1966171168
    %v1601 = vunpack.c.0.s8 %v1600
    %v1602 = vlaneseq
    %v1603 = vshrl.u32 %v1602, 7
    %v1604 = vsub.s32 %v1601, %v1603
    %v1605 = vrot.slane %v1359, %v1604
    %v1607 = vunpack.c.l.s4 1966171168
    %v1608 = vunpack.c.0.s8 %v1607
    %v1609 = vlaneseq
    %v1610 = vshrl.u32 %v1609, 7
    %v1611 = vsub.s32 %v1608, %v1610
    %v1612 = vrot.slane %v1598, %v1611
    %v1613 = vcombine.high %v1605, %v1605
    %v1614 = vcombine.high %v1612, %v1612
    %v1616 = vunpack.c.l.s4 1966171168
    %v1617 = vunpack.c.0.s8 %v1616
    %v1618 = vlaneseq
    %v1619 = vshrl.u32 %v1618, 7
    %v1620 = vsub.s32 %v1617, %v1619
    %v1621 = vrot.slane %v1605, %v1620
    %v1623 = vunpack.c.l.s4 1966171168
    %v1624 = vunpack.c.0.s8 %v1623
    %v1625 = vlaneseq
    %v1626 = vshrl.u32 %v1625, 7
    %v1627 = vsub.s32 %v1624, %v1626
    %v1628 = vrot.slane %v1612, %v1627
    %v1630 = vunpack.c.l.s4 1966171168
    %v1631 = vunpack.c.0.s8 %v1630
    %v1632 = vlaneseq
    %v1633 = vshrl.u32 %v1632, 7
    %v1634 = vsub.s32 %v1631, %v1633
    %v1635 = vrot.slane %v1613, %v1634
    %v1637 = vunpack.c.l.s4 1966171168
    %v1638 = vunpack.c.0.s8 %v1637
    %v1639 = vlaneseq
    %v1640 = vshrl.u32 %v1639, 7
    %v1641 = vsub.s32 %v1638, %v1640
    %v1642 = vrot.slane %v1614, %v1641
    %v1643 = vcombine.high %v1621, %v1621
    %v1644 = vcombine.high %v1628, %v1628
    %v1645 = vcombine.high %v1635, %v1635
    %v1646 = vcombine.high %v1642, %v1642
    %v1647 = vlaneseq
    %v1648 = vshrl.u32 %v1647, 7
    %v1649 = vsub.s32 0, %v1648
    %v1650 = vrot.slane %v1621, %v1649
    %v1651 = vlaneseq
    %v1652 = vshrl.u32 %v1651, 7
    %v1653 = vsub.s32 0, %v1652
    %v1654 = vrot.slane %v1635, %v1653
    %v1655 = vlaneseq
    %v1656 = vshrl.u32 %v1655, 7
    %v1657 = vsub.s32 0, %v1656
    %v1658 = vrot.slane %v1643, %v1657
    %v1659 = vlaneseq
    %v1660 = vshrl.u32 %v1659, 7
    %v1661 = vsub.s32 0, %v1660
    %v1662 = vrot.slane %v1645, %v1661
    %v1663 = vlaneseq
    %v1664 = vshrl.u32 %v1663, 7
    %v1665 = vsub.s32 0, %v1664
    %v1666 = vrot.slane %v1628, %v1665
    %v1667 = vlaneseq
    %v1668 = vshrl.u32 %v1667, 7
    %v1669 = vsub.s32 0, %v1668
    %v1670 = vrot.slane %v1642, %v1669
    %v1671 = vlaneseq
    %v1672 = vshrl.u32 %v1671, 7
    %v1673 = vsub.s32 0, %v1672
    %v1674 = vrot.slane %v1644, %v1673
    %v1675 = vlaneseq
    %v1676 = vshrl.u32 %v1675, 7
    %v1677 = vsub.s32 0, %v1676
    %v1678 = vrot.slane %v1646, %v1677
    %v1687 = vsub.f32 %v1650, %v96
    %v1688 = vsub.f32 %v1654, %v96
    %v1689 = vsub.f32 %v1658, %v96
    %v1690 = vsub.f32 %v1662, %v96
    %v1691 = vsub.f32 %v1666, %v96
    %v1692 = vsub.f32 %v1670, %v96
    %v1693 = vsub.f32 %v1674, %v96
    %v1694 = vsub.f32 %v1678, %v96
    %v1695 = vmul.f32 %v1687, %v1590
    %v1696 = vmul.f32 %v1688, %v1591
    %v1697 = vmul.f32 %v1689, %v1592
    %v1698 = vmul.f32 %v1690, %v1593
    %v1699 = vmul.f32 %v1691, %v1594
    %v1700 = vmul.f32 %v1692, %v1595
    %v1701 = vmul.f32 %v1693, %v1596
    %v1702 = vmul.f32 %v1694, %v1597
    %v1703 = vsel %vm106, %v1695, 0.0
    %1704 = vadd.xlane.f32.xlu0 %v1703
    %v1705 = vpop.xlane.xlu0 %1704
    %v1706 = vsel %vm106, %v1696, 0.0
    %1707 = vadd.xlane.f32.xlu0 %v1706
    %v1708 = vpop.xlane.xlu0 %1707
    %v1709 = vsel %vm106, %v1697, 0.0
    %1710 = vadd.xlane.f32.xlu0 %v1709
    %v1711 = vpop.xlane.xlu0 %1710
    %v1712 = vsel %vm106, %v1698, 0.0
    %1713 = vadd.xlane.f32.xlu0 %v1712
    %v1714 = vpop.xlane.xlu0 %1713
    %v1715 = vsel %vm106, %v1699, 0.0
    %1716 = vadd.xlane.f32.xlu0 %v1715
    %v1717 = vpop.xlane.xlu0 %1716
    %v1718 = vsel %vm106, %v1700, 0.0
    %1719 = vadd.xlane.f32.xlu0 %v1718
    %v1720 = vpop.xlane.xlu0 %1719
    %v1721 = vsel %vm106, %v1701, 0.0
    %1722 = vadd.xlane.f32.xlu0 %v1721
    %v1723 = vpop.xlane.xlu0 %1722
    %v1724 = vsel %vm106, %v1702, 0.0
    %1725 = vadd.xlane.f32.xlu0 %v1724
    %v1726 = vpop.xlane.xlu0 %1725
    %v1727 = vmul.f32 %v1705, 0.5
    %v1728 = vmul.f32 %v1708, 0.5
    %v1729 = vmul.f32 %v1711, 0.5
    %v1730 = vmul.f32 %v1714, 0.5
    %v1731 = vmul.f32 %v1717, 0.5
    %v1732 = vmul.f32 %v1720, 0.5
    %v1733 = vmul.f32 %v1723, 0.5
    %v1734 = vmul.f32 %v1726, 0.5
    %v1743 = vlaneseq
    %v1744 = vshrl.u32 %v1743, 7
    %v1745 = vsub.s32 %v497, %v1744
    %v1746 = vrot.slane %v1727, %v1745
    %v1747 = vlaneseq
    %v1748 = vshrl.u32 %v1747, 7
    %v1749 = vsub.s32 %v497, %v1748
    %v1750 = vrot.slane %v1728, %v1749
    %v1751 = vlaneseq
    %v1752 = vshrl.u32 %v1751, 7
    %v1753 = vsub.s32 %v497, %v1752
    %v1754 = vrot.slane %v1729, %v1753
    %v1755 = vlaneseq
    %v1756 = vshrl.u32 %v1755, 7
    %v1757 = vsub.s32 %v497, %v1756
    %v1758 = vrot.slane %v1730, %v1757
    %v1759 = vlaneseq
    %v1760 = vshrl.u32 %v1759, 7
    %v1761 = vsub.s32 %v497, %v1760
    %v1762 = vrot.slane %v1731, %v1761
    %v1763 = vlaneseq
    %v1764 = vshrl.u32 %v1763, 7
    %v1765 = vsub.s32 %v497, %v1764
    %v1766 = vrot.slane %v1732, %v1765
    %v1767 = vlaneseq
    %v1768 = vshrl.u32 %v1767, 7
    %v1769 = vsub.s32 %v497, %v1768
    %v1770 = vrot.slane %v1733, %v1769
    %v1771 = vlaneseq
    %v1772 = vshrl.u32 %v1771, 7
    %v1773 = vsub.s32 %v497, %v1772
    %v1774 = vrot.slane %v1734, %v1773
    %v1775 = vsel %vm530, %v1750, %v1746
    %v1776 = vsel %vm532, %v1754, %v1775
    %v1777 = vsel %vm534, %v1758, %v1776
    %v1778 = vsel %vm536, %v1762, %v1777
    %v1779 = vsel %vm538, %v1766, %v1778
    %v1780 = vsel %vm540, %v1770, %v1779
    %v1781 = vsel %vm542, %v1774, %v1780
    %v1783 = vsub.f32 %v486, %v1781
    %v1784 = vsel %vm546, %v1783, -inf
    %1785 = vmax.xlane.f32.xlu0 %v1784
    %v1786 = vpop.xlane.xlu0 %1785
    %v1787 = vsub.f32 %v1783, %v1786
    %v1788 = vmul.f32 %v1787, 1.442695
    %v1789 = vpow.pop %v1788
    %v1790 = vsel %vm546, %v1789, 0.0
    %1791 = vadd.xlane.f32.xlu0 %v1790
    %v1792 = vpop.xlane.xlu0 %1791
    %v1793 = vlaneseq
    %v1794 = vshrl.u32 %v1793, 7
    %v1795 = vsub.s32 0, %v1794
    %v1796 = vrot.slane %v1789, %v1795
    %1798 = vbcast.lane.b32.xlu0 %v1796, 256
    %v1799 = vpop.permute.xlu0 %1798
    %v1800 = vlaneseq
    %v1801 = vshrl.u32 %v1800, 7
    %v1802 = vsub.s32 1, %v1801
    %v1803 = vrot.slane %v1789, %v1802
    %1805 = vbcast.lane.b32.xlu0 %v1803, 256
    %v1806 = vpop.permute.xlu0 %1805
    %v1807 = vlaneseq
    %v1808 = vshrl.u32 %v1807, 7
    %v1809 = vsub.s32 2, %v1808
    %v1810 = vrot.slane %v1789, %v1809
    %1812 = vbcast.lane.b32.xlu0 %v1810, 256
    %v1813 = vpop.permute.xlu0 %1812
    %v1814 = vlaneseq
    %v1815 = vshrl.u32 %v1814, 7
    %v1816 = vsub.s32 3, %v1815
    %v1817 = vrot.slane %v1789, %v1816
    %1819 = vbcast.lane.b32.xlu0 %v1817, 256
    %v1820 = vpop.permute.xlu0 %1819
    %v1821 = vlaneseq
    %v1822 = vshrl.u32 %v1821, 7
    %v1823 = vsub.s32 4, %v1822
    %v1824 = vrot.slane %v1789, %v1823
    %1826 = vbcast.lane.b32.xlu0 %v1824, 256
    %v1827 = vpop.permute.xlu0 %1826
    %v1828 = vlaneseq
    %v1829 = vshrl.u32 %v1828, 7
    %v1830 = vsub.s32 5, %v1829
    %v1831 = vrot.slane %v1789, %v1830
    %1833 = vbcast.lane.b32.xlu0 %v1831, 256
    %v1834 = vpop.permute.xlu0 %1833
    %v1835 = vlaneseq
    %v1836 = vshrl.u32 %v1835, 7
    %v1837 = vsub.s32 6, %v1836
    %v1838 = vrot.slane %v1789, %v1837
    %1840 = vbcast.lane.b32.xlu0 %v1838, 256
    %v1841 = vpop.permute.xlu0 %1840
    %v1842 = vlaneseq
    %v1843 = vshrl.u32 %v1842, 7
    %v1844 = vsub.s32 7, %v1843
    %v1845 = vrot.slane %v1789, %v1844
    %1847 = vbcast.lane.b32.xlu0 %v1845, 256
    %v1848 = vpop.permute.xlu0 %1847
    %v1849 = vmul.f32 %v1799, %v1590
    %v1850 = vmul.f32 %v1806, %v1591
    %v1851 = vmul.f32 %v1813, %v1592
    %v1852 = vmul.f32 %v1820, %v1593
    %v1853 = vmul.f32 %v1827, %v1594
    %v1854 = vmul.f32 %v1834, %v1595
    %v1855 = vmul.f32 %v1841, %v1596
    %v1856 = vmul.f32 %v1848, %v1597
    %v1857 = vsel %vm106, %v1849, 0.0
    %v1858 = vrot.slane %v1857, 4
    %v1859 = vadd.f32 %v1857, %v1858
    %v1860 = vrot.slane %v1859, 2
    %v1861 = vadd.f32 %v1859, %v1860
    %v1862 = vrot.slane %v1861, 1
    %v1863 = vadd.f32 %v1861, %v1862
    %v1864 = vsel %vm106, %v1850, 0.0
    %v1865 = vrot.slane %v1864, 4
    %v1866 = vadd.f32 %v1864, %v1865
    %v1867 = vrot.slane %v1866, 2
    %v1868 = vadd.f32 %v1866, %v1867
    %v1869 = vrot.slane %v1868, 1
    %v1870 = vadd.f32 %v1868, %v1869
    %v1871 = vsel %vm106, %v1851, 0.0
    %v1872 = vrot.slane %v1871, 4
    %v1873 = vadd.f32 %v1871, %v1872
    %v1874 = vrot.slane %v1873, 2
    %v1875 = vadd.f32 %v1873, %v1874
    %v1876 = vrot.slane %v1875, 1
    %v1877 = vadd.f32 %v1875, %v1876
    %v1878 = vsel %vm106, %v1852, 0.0
    %v1879 = vrot.slane %v1878, 4
    %v1880 = vadd.f32 %v1878, %v1879
    %v1881 = vrot.slane %v1880, 2
    %v1882 = vadd.f32 %v1880, %v1881
    %v1883 = vrot.slane %v1882, 1
    %v1884 = vadd.f32 %v1882, %v1883
    %v1885 = vsel %vm106, %v1853, 0.0
    %v1886 = vrot.slane %v1885, 4
    %v1887 = vadd.f32 %v1885, %v1886
    %v1888 = vrot.slane %v1887, 2
    %v1889 = vadd.f32 %v1887, %v1888
    %v1890 = vrot.slane %v1889, 1
    %v1891 = vadd.f32 %v1889, %v1890
    %v1892 = vsel %vm106, %v1854, 0.0
    %v1893 = vrot.slane %v1892, 4
    %v1894 = vadd.f32 %v1892, %v1893
    %v1895 = vrot.slane %v1894, 2
    %v1896 = vadd.f32 %v1894, %v1895
    %v1897 = vrot.slane %v1896, 1
    %v1898 = vadd.f32 %v1896, %v1897
    %v1899 = vsel %vm106, %v1855, 0.0
    %v1900 = vrot.slane %v1899, 4
    %v1901 = vadd.f32 %v1899, %v1900
    %v1902 = vrot.slane %v1901, 2
    %v1903 = vadd.f32 %v1901, %v1902
    %v1904 = vrot.slane %v1903, 1
    %v1905 = vadd.f32 %v1903, %v1904
    %v1906 = vsel %vm106, %v1856, 0.0
    %v1907 = vrot.slane %v1906, 4
    %v1908 = vadd.f32 %v1906, %v1907
    %v1909 = vrot.slane %v1908, 2
    %v1910 = vadd.f32 %v1908, %v1909
    %v1911 = vrot.slane %v1910, 1
    %v1912 = vadd.f32 %v1910, %v1911
    %v1913 = vsub.f32 0.0, %v1863
    %v1914 = vsub.f32 0.0, %v1870
    %v1915 = vsub.f32 0.0, %v1877
    %v1916 = vsub.f32 0.0, %v1884
    %v1917 = vsub.f32 0.0, %v1891
    %v1918 = vsub.f32 0.0, %v1898
    %v1919 = vsub.f32 0.0, %v1905
    %v1920 = vsub.f32 0.0, %v1912
    %v1921 = vrcp.pop %v1792
    %v1923 = vrot.slane %v1921, 1
    %v1924 = vrot.slane %v1921, 2
    %v1925 = vrot.slane %v1921, 3
    %v1926 = vrot.slane %v1921, 4
    %v1927 = vrot.slane %v1921, 5
    %v1928 = vrot.slane %v1921, 6
    %v1929 = vrot.slane %v1921, 7
    %v1938 = vmul.f32 %v1913, %v1921
    %v1939 = vmul.f32 %v1914, %v1923
    %v1940 = vmul.f32 %v1915, %v1924
    %v1941 = vmul.f32 %v1916, %v1925
    %v1942 = vmul.f32 %v1917, %v1926
    %v1943 = vmul.f32 %v1918, %v1927
    %v1944 = vmul.f32 %v1919, %v1928
    %v1945 = vmul.f32 %v1920, %v1929
    %v1946 = vmul.f32 %v709, %v1938
    %v1947 = vmul.f32 %v709, %v1939
    %v1948 = vmul.f32 %v709, %v1940
    %v1949 = vmul.f32 %v709, %v1941
    %v1950 = vmul.f32 %v709, %v1942
    %v1951 = vmul.f32 %v709, %v1943
    %v1952 = vmul.f32 %v709, %v1944
    %v1953 = vmul.f32 %v709, %v1945
    %v1962 = vrot.slane %v1947, 7
    %v1963 = vsel %vm530, %v1962, %v1946
    %v1964 = vrot.slane %v1948, 6
    %v1965 = vsel %vm532, %v1964, %v1963
    %v1966 = vrot.slane %v1949, 5
    %v1967 = vsel %vm534, %v1966, %v1965
    %v1968 = vrot.slane %v1950, 4
    %v1969 = vsel %vm536, %v1968, %v1967
    %v1970 = vrot.slane %v1951, 3
    %v1971 = vsel %vm538, %v1970, %v1969
    %v1972 = vrot.slane %v1952, 2
    %v1973 = vsel %vm540, %v1972, %v1971
    %v1974 = vrot.slane %v1953, 1
    %v1975 = vsel %vm542, %v1974, %v1973
    %v1977 = vadd.f32 %v1359, %v1975
    %v1979 = vsel %vm106, %v1977, 0
    %1981 = vmatprep.subr.mxu0 0.0
    %1982 = vmatpush1.msra.mxu0 0.0
    %1983 = vmatprep.subr.mxu0 0.0
    %1984 = vmatpush1.msra.mxu0 0.0
    %1985 = vmatprep.subr.mxu0 0.0
    %1986 = vmatpush1.msra.mxu0 0.0
    %1987 = vmatprep.subr.mxu0 0.0
    %1988 = vmatpush1.msra.mxu0 0.0
    %1989 = vmatprep.subr.mxu0 0.0
    %1990 = vmatpush1.msra.mxu0 0.0
    %1991 = vmatprep.subr.mxu0 0.0
    %1992 = vmatpush1.msra.mxu0 0.0
    %1993 = vmatprep.subr.mxu0 0.0
    %1994 = vmatpush1.msra.mxu0 0.0
    %1995 = vmatprep.subr.mxu0 0.0
    %1996 = vmatpush1.msra.mxu0 0.0
    %1997 = vmatprep.subr.mxu0 0.0
    %1998 = vmatpush1.msra.mxu0 0.0
    %1999 = vmatprep.subr.mxu0 0.0
    %2000 = vmatpush1.msra.mxu0 0.0
    %2001 = vmatprep.subr.mxu0 0.0
    %2002 = vmatpush1.msra.mxu0 0.0
    %2003 = vmatprep.subr.mxu0 0.0
    %2004 = vmatpush1.msra.mxu0 0.0
    %2005 = vmatprep.subr.mxu0 %v105
    %2006 = vmatpush1.msra.mxu0 %v104
    %2007 = vmatprep.subr.mxu0 %v103
    %2008 = vmatpush1.msra.mxu0 %v102
    %2009 = vmatprep.subr.mxu0 %v101
    %2010 = vmatpush1.msra.mxu0 %v100
    %2011 = vmatprep.subr.mxu0 %v99
    %2012 = vmatpush1.msra.mxu0 %v98
    %2013 = vmatprep.subr.mxu0 0.0
    %2014 = vmatpush2.msra.mxu0 0.0
    %2015 = vmatprep.subr.mxu0 0.0
    %2016 = vmatpush2.msra.mxu0 0.0
    %2017 = vmatprep.subr.mxu0 0.0
    %2018 = vmatpush2.msra.mxu0 0.0
    %2019 = vmatprep.subr.mxu0 0.0
    %2020 = vmatpush2.msra.mxu0 0.0
    %2021 = vmatprep.subr.mxu0 0.0
    %2022 = vmatpush2.msra.mxu0 0.0
    %2023 = vmatprep.subr.mxu0 0.0
    %2024 = vmatpush2.msra.mxu0 0.0
    %2025 = vmatprep.subr.mxu0 0.0
    %2026 = vmatpush2.msra.mxu0 0.0
    %2027 = vmatprep.subr.mxu0 0.0
    %2028 = vmatpush2.msra.mxu0 0.0
    %2029 = vmatprep.subr.mxu0 0.0
    %2030 = vmatpush2.msra.mxu0 0.0
    %2031 = vmatprep.subr.mxu0 0.0
    %2032 = vmatpush2.msra.mxu0 0.0
    %2033 = vmatprep.subr.mxu0 0.0
    %2034 = vmatpush2.msra.mxu0 0.0
    %2035 = vmatprep.subr.mxu0 0.0
    %2036 = vmatpush2.msra.mxu0 0.0
    %2037 = vmatprep.subr.mxu0 0.0
    %2038 = vmatpush2.msra.mxu0 0.0
    %2039 = vmatprep.subr.mxu0 0.0
    %2040 = vmatpush2.msra.mxu0 0.0
    %2041 = vmatprep.subr.mxu0 0.0
    %2042 = vmatpush2.msra.mxu0 0.0
    %2043 = vmatprep.subr.mxu0 0.0
    %2044 = vmatpush2.msra.mxu0 0.0
    %2045 = vmatprep.mubr.f32.mxu0 0.0
    %2046 = vmatmul.mubr.f32.gmra.mxu0 %v1979
    %v2047 = vpop.f32.mrf.mxu0
    %v2048 = vadd.f32 0.0, %v2047
    %v2049 = vpop.f32.mrf.mxu0
    %v2050 = vadd.f32 0.0, %v2049
    %2051 = vdwg.mxu0
    %2053 = vrot.lane.b32.xlu0 %v2048, 96
    %v2054 = vpop.permute.xlu0 %2053
    %2056 = vrot.lane.b32.xlu0 %v2048, 64
    %v2057 = vpop.permute.xlu0 %2056
    %2059 = vrot.lane.b32.xlu0 %v2048, 32
    %v2060 = vpop.permute.xlu0 %2059
    %2063 = vrot.lane.b32.xlu0 %v2050, 96
    %v2064 = vpop.permute.xlu0 %2063
    %2066 = vrot.lane.b32.xlu0 %v2050, 64
    %v2067 = vpop.permute.xlu0 %2066
    %2069 = vrot.lane.b32.xlu0 %v2050, 32
    %v2070 = vpop.permute.xlu0 %2069
    %v2072 = vcombine.low %v2048, %v2057
    %v2073 = vcombine.high %v2048, %v2057
    %v2075 = vunpack.c.l.s4 1983009808
    %v2076 = vunpack.c.0.s8 %v2075
    %v2077 = vlaneseq
    %v2078 = vshrl.u32 %v2077, 7
    %v2079 = vsub.s32 %v2076, %v2078
    %v2080 = vrot.slane %v2072, %v2079
    %v2082 = vunpack.c.l.s4 1983009808
    %v2083 = vunpack.c.0.s8 %v2082
    %v2084 = vlaneseq
    %v2085 = vshrl.u32 %v2084, 7
    %v2086 = vsub.s32 %v2083, %v2085
    %v2087 = vrot.slane %v2073, %v2086
    %v2088 = vcombine.low %v2054, %v2060
    %v2089 = vcombine.high %v2054, %v2060
    %v2091 = vunpack.c.l.s4 1983009808
    %v2092 = vunpack.c.0.s8 %v2091
    %v2093 = vlaneseq
    %v2094 = vshrl.u32 %v2093, 7
    %v2095 = vsub.s32 %v2092, %v2094
    %v2096 = vrot.slane %v2088, %v2095
    %v2098 = vunpack.c.l.s4 1983009808
    %v2099 = vunpack.c.0.s8 %v2098
    %v2100 = vlaneseq
    %v2101 = vshrl.u32 %v2100, 7
    %v2102 = vsub.s32 %v2099, %v2101
    %v2103 = vrot.slane %v2089, %v2102
    %v2104 = vcombine.low %v2050, %v2067
    %v2105 = vcombine.high %v2050, %v2067
    %v2107 = vunpack.c.l.s4 1983009808
    %v2108 = vunpack.c.0.s8 %v2107
    %v2109 = vlaneseq
    %v2110 = vshrl.u32 %v2109, 7
    %v2111 = vsub.s32 %v2108, %v2110
    %v2112 = vrot.slane %v2104, %v2111
    %v2114 = vunpack.c.l.s4 1983009808
    %v2115 = vunpack.c.0.s8 %v2114
    %v2116 = vlaneseq
    %v2117 = vshrl.u32 %v2116, 7
    %v2118 = vsub.s32 %v2115, %v2117
    %v2119 = vrot.slane %v2105, %v2118
    %v2120 = vcombine.low %v2064, %v2070
    %v2121 = vcombine.high %v2064, %v2070
    %v2123 = vunpack.c.l.s4 1983009808
    %v2124 = vunpack.c.0.s8 %v2123
    %v2125 = vlaneseq
    %v2126 = vshrl.u32 %v2125, 7
    %v2127 = vsub.s32 %v2124, %v2126
    %v2128 = vrot.slane %v2120, %v2127
    %v2130 = vunpack.c.l.s4 1983009808
    %v2131 = vunpack.c.0.s8 %v2130
    %v2132 = vlaneseq
    %v2133 = vshrl.u32 %v2132, 7
    %v2134 = vsub.s32 %v2131, %v2133
    %v2135 = vrot.slane %v2121, %v2134
    %v2136 = vcombine.low %v2080, %v2096
    %v2137 = vcombine.high %v2080, %v2096
    %v2139 = vunpack.c.l.s4 1934713408
    %v2140 = vunpack.c.0.s8 %v2139
    %v2141 = vlaneseq
    %v2142 = vshrl.u32 %v2141, 7
    %v2143 = vsub.s32 %v2140, %v2142
    %v2144 = vrot.slane %v2136, %v2143
    %v2146 = vunpack.c.l.s4 1934713408
    %v2147 = vunpack.c.0.s8 %v2146
    %v2148 = vlaneseq
    %v2149 = vshrl.u32 %v2148, 7
    %v2150 = vsub.s32 %v2147, %v2149
    %v2151 = vrot.slane %v2137, %v2150
    %v2152 = vcombine.low %v2087, %v2103
    %v2153 = vcombine.high %v2087, %v2103
    %v2155 = vunpack.c.l.s4 1934713408
    %v2156 = vunpack.c.0.s8 %v2155
    %v2157 = vlaneseq
    %v2158 = vshrl.u32 %v2157, 7
    %v2159 = vsub.s32 %v2156, %v2158
    %v2160 = vrot.slane %v2152, %v2159
    %v2162 = vunpack.c.l.s4 1934713408
    %v2163 = vunpack.c.0.s8 %v2162
    %v2164 = vlaneseq
    %v2165 = vshrl.u32 %v2164, 7
    %v2166 = vsub.s32 %v2163, %v2165
    %v2167 = vrot.slane %v2153, %v2166
    %v2168 = vcombine.low %v2112, %v2128
    %v2169 = vcombine.high %v2112, %v2128
    %v2171 = vunpack.c.l.s4 1934713408
    %v2172 = vunpack.c.0.s8 %v2171
    %v2173 = vlaneseq
    %v2174 = vshrl.u32 %v2173, 7
    %v2175 = vsub.s32 %v2172, %v2174
    %v2176 = vrot.slane %v2168, %v2175
    %v2178 = vunpack.c.l.s4 1934713408
    %v2179 = vunpack.c.0.s8 %v2178
    %v2180 = vlaneseq
    %v2181 = vshrl.u32 %v2180, 7
    %v2182 = vsub.s32 %v2179, %v2181
    %v2183 = vrot.slane %v2169, %v2182
    %v2184 = vcombine.low %v2119, %v2135
    %v2185 = vcombine.high %v2119, %v2135
    %v2187 = vunpack.c.l.s4 1934713408
    %v2188 = vunpack.c.0.s8 %v2187
    %v2189 = vlaneseq
    %v2190 = vshrl.u32 %v2189, 7
    %v2191 = vsub.s32 %v2188, %v2190
    %v2192 = vrot.slane %v2184, %v2191
    %v2194 = vunpack.c.l.s4 1934713408
    %v2195 = vunpack.c.0.s8 %v2194
    %v2196 = vlaneseq
    %v2197 = vshrl.u32 %v2196, 7
    %v2198 = vsub.s32 %v2195, %v2197
    %v2199 = vrot.slane %v2185, %v2198
    %v2200 = vcombine.low %v2144, %v2176
    %v2201 = vcombine.high %v2144, %v2176
    %v2202 = vcombine.low %v2151, %v2183
    %v2203 = vcombine.high %v2151, %v2183
    %v2204 = vcombine.low %v2160, %v2192
    %v2205 = vcombine.high %v2160, %v2192
    %v2206 = vcombine.low %v2167, %v2199
    %v2207 = vcombine.high %v2167, %v2199
    %v2208 = vsub.f32 %v2200, %v97
    %v2209 = vsub.f32 %v2201, %v97
    %v2210 = vsub.f32 %v2202, %v97
    %v2211 = vsub.f32 %v2203, %v97
    %v2212 = vsub.f32 %v2204, %v97
    %v2213 = vsub.f32 %v2205, %v97
    %v2214 = vsub.f32 %v2206, %v97
    %v2215 = vsub.f32 %v2207, %v97
    %v2216 = vcombine.high %v1977, %v1977
    %v2218 = vunpack.c.l.s4 1966171168
    %v2219 = vunpack.c.0.s8 %v2218
    %v2220 = vlaneseq
    %v2221 = vshrl.u32 %v2220, 7
    %v2222 = vsub.s32 %v2219, %v2221
    %v2223 = vrot.slane %v1977, %v2222
    %v2225 = vunpack.c.l.s4 1966171168
    %v2226 = vunpack.c.0.s8 %v2225
    %v2227 = vlaneseq
    %v2228 = vshrl.u32 %v2227, 7
    %v2229 = vsub.s32 %v2226, %v2228
    %v2230 = vrot.slane %v2216, %v2229
    %v2231 = vcombine.high %v2223, %v2223
    %v2232 = vcombine.high %v2230, %v2230
    %v2234 = vunpack.c.l.s4 1966171168
    %v2235 = vunpack.c.0.s8 %v2234
    %v2236 = vlaneseq
    %v2237 = vshrl.u32 %v2236, 7
    %v2238 = vsub.s32 %v2235, %v2237
    %v2239 = vrot.slane %v2223, %v2238
    %v2241 = vunpack.c.l.s4 1966171168
    %v2242 = vunpack.c.0.s8 %v2241
    %v2243 = vlaneseq
    %v2244 = vshrl.u32 %v2243, 7
    %v2245 = vsub.s32 %v2242, %v2244
    %v2246 = vrot.slane %v2230, %v2245
    %v2248 = vunpack.c.l.s4 1966171168
    %v2249 = vunpack.c.0.s8 %v2248
    %v2250 = vlaneseq
    %v2251 = vshrl.u32 %v2250, 7
    %v2252 = vsub.s32 %v2249, %v2251
    %v2253 = vrot.slane %v2231, %v2252
    %v2255 = vunpack.c.l.s4 1966171168
    %v2256 = vunpack.c.0.s8 %v2255
    %v2257 = vlaneseq
    %v2258 = vshrl.u32 %v2257, 7
    %v2259 = vsub.s32 %v2256, %v2258
    %v2260 = vrot.slane %v2232, %v2259
    %v2261 = vcombine.high %v2239, %v2239
    %v2262 = vcombine.high %v2246, %v2246
    %v2263 = vcombine.high %v2253, %v2253
    %v2264 = vcombine.high %v2260, %v2260
    %v2265 = vlaneseq
    %v2266 = vshrl.u32 %v2265, 7
    %v2267 = vsub.s32 0, %v2266
    %v2268 = vrot.slane %v2239, %v2267
    %v2269 = vlaneseq
    %v2270 = vshrl.u32 %v2269, 7
    %v2271 = vsub.s32 0, %v2270
    %v2272 = vrot.slane %v2253, %v2271
    %v2273 = vlaneseq
    %v2274 = vshrl.u32 %v2273, 7
    %v2275 = vsub.s32 0, %v2274
    %v2276 = vrot.slane %v2261, %v2275
    %v2277 = vlaneseq
    %v2278 = vshrl.u32 %v2277, 7
    %v2279 = vsub.s32 0, %v2278
    %v2280 = vrot.slane %v2263, %v2279
    %v2281 = vlaneseq
    %v2282 = vshrl.u32 %v2281, 7
    %v2283 = vsub.s32 0, %v2282
    %v2284 = vrot.slane %v2246, %v2283
    %v2285 = vlaneseq
    %v2286 = vshrl.u32 %v2285, 7
    %v2287 = vsub.s32 0, %v2286
    %v2288 = vrot.slane %v2260, %v2287
    %v2289 = vlaneseq
    %v2290 = vshrl.u32 %v2289, 7
    %v2291 = vsub.s32 0, %v2290
    %v2292 = vrot.slane %v2262, %v2291
    %v2293 = vlaneseq
    %v2294 = vshrl.u32 %v2293, 7
    %v2295 = vsub.s32 0, %v2294
    %v2296 = vrot.slane %v2264, %v2295
    %v2305 = vsub.f32 %v2268, %v96
    %v2306 = vsub.f32 %v2272, %v96
    %v2307 = vsub.f32 %v2276, %v96
    %v2308 = vsub.f32 %v2280, %v96
    %v2309 = vsub.f32 %v2284, %v96
    %v2310 = vsub.f32 %v2288, %v96
    %v2311 = vsub.f32 %v2292, %v96
    %v2312 = vsub.f32 %v2296, %v96
    %v2313 = vmul.f32 %v2305, %v2208
    %v2314 = vmul.f32 %v2306, %v2209
    %v2315 = vmul.f32 %v2307, %v2210
    %v2316 = vmul.f32 %v2308, %v2211
    %v2317 = vmul.f32 %v2309, %v2212
    %v2318 = vmul.f32 %v2310, %v2213
    %v2319 = vmul.f32 %v2311, %v2214
    %v2320 = vmul.f32 %v2312, %v2215
    %v2321 = vsel %vm106, %v2313, 0.0
    %2322 = vadd.xlane.f32.xlu0 %v2321
    %v2323 = vpop.xlane.xlu0 %2322
    %v2324 = vsel %vm106, %v2314, 0.0
    %2325 = vadd.xlane.f32.xlu0 %v2324
    %v2326 = vpop.xlane.xlu0 %2325
    %v2327 = vsel %vm106, %v2315, 0.0
    %2328 = vadd.xlane.f32.xlu0 %v2327
    %v2329 = vpop.xlane.xlu0 %2328
    %v2330 = vsel %vm106, %v2316, 0.0
    %2331 = vadd.xlane.f32.xlu0 %v2330
    %v2332 = vpop.xlane.xlu0 %2331
    %v2333 = vsel %vm106, %v2317, 0.0
    %2334 = vadd.xlane.f32.xlu0 %v2333
    %v2335 = vpop.xlane.xlu0 %2334
    %v2336 = vsel %vm106, %v2318, 0.0
    %2337 = vadd.xlane.f32.xlu0 %v2336
    %v2338 = vpop.xlane.xlu0 %2337
    %v2339 = vsel %vm106, %v2319, 0.0
    %2340 = vadd.xlane.f32.xlu0 %v2339
    %v2341 = vpop.xlane.xlu0 %2340
    %v2342 = vsel %vm106, %v2320, 0.0
    %2343 = vadd.xlane.f32.xlu0 %v2342
    %v2344 = vpop.xlane.xlu0 %2343
    %v2345 = vmul.f32 %v2323, 0.5
    %v2346 = vmul.f32 %v2326, 0.5
    %v2347 = vmul.f32 %v2329, 0.5
    %v2348 = vmul.f32 %v2332, 0.5
    %v2349 = vmul.f32 %v2335, 0.5
    %v2350 = vmul.f32 %v2338, 0.5
    %v2351 = vmul.f32 %v2341, 0.5
    %v2352 = vmul.f32 %v2344, 0.5
    %v2361 = vlaneseq
    %v2362 = vshrl.u32 %v2361, 7
    %v2363 = vsub.s32 %v497, %v2362
    %v2364 = vrot.slane %v2345, %v2363
    %v2365 = vlaneseq
    %v2366 = vshrl.u32 %v2365, 7
    %v2367 = vsub.s32 %v497, %v2366
    %v2368 = vrot.slane %v2346, %v2367
    %v2369 = vlaneseq
    %v2370 = vshrl.u32 %v2369, 7
    %v2371 = vsub.s32 %v497, %v2370
    %v2372 = vrot.slane %v2347, %v2371
    %v2373 = vlaneseq
    %v2374 = vshrl.u32 %v2373, 7
    %v2375 = vsub.s32 %v497, %v2374
    %v2376 = vrot.slane %v2348, %v2375
    %v2377 = vlaneseq
    %v2378 = vshrl.u32 %v2377, 7
    %v2379 = vsub.s32 %v497, %v2378
    %v2380 = vrot.slane %v2349, %v2379
    %v2381 = vlaneseq
    %v2382 = vshrl.u32 %v2381, 7
    %v2383 = vsub.s32 %v497, %v2382
    %v2384 = vrot.slane %v2350, %v2383
    %v2385 = vlaneseq
    %v2386 = vshrl.u32 %v2385, 7
    %v2387 = vsub.s32 %v497, %v2386
    %v2388 = vrot.slane %v2351, %v2387
    %v2389 = vlaneseq
    %v2390 = vshrl.u32 %v2389, 7
    %v2391 = vsub.s32 %v497, %v2390
    %v2392 = vrot.slane %v2352, %v2391
    %v2393 = vsel %vm530, %v2368, %v2364
    %v2394 = vsel %vm532, %v2372, %v2393
    %v2395 = vsel %vm534, %v2376, %v2394
    %v2396 = vsel %vm536, %v2380, %v2395
    %v2397 = vsel %vm538, %v2384, %v2396
    %v2398 = vsel %vm540, %v2388, %v2397
    %v2399 = vsel %vm542, %v2392, %v2398
    %v2401 = vsub.f32 %v486, %v2399
    %v2402 = vsel %vm546, %v2401, -inf
    %2403 = vmax.xlane.f32.xlu0 %v2402
    %v2404 = vpop.xlane.xlu0 %2403
    %v2405 = vsub.f32 %v2401, %v2404
    %v2406 = vmul.f32 %v2405, 1.442695
    %v2407 = vpow.pop %v2406
    %v2408 = vsel %vm546, %v2407, 0.0
    %2409 = vadd.xlane.f32.xlu0 %v2408
    %v2410 = vpop.xlane.xlu0 %2409
    %v2411 = vlaneseq
    %v2412 = vshrl.u32 %v2411, 7
    %v2413 = vsub.s32 0, %v2412
    %v2414 = vrot.slane %v2407, %v2413
    %2416 = vbcast.lane.b32.xlu0 %v2414, 256
    %v2417 = vpop.permute.xlu0 %2416
    %v2418 = vlaneseq
    %v2419 = vshrl.u32 %v2418, 7
    %v2420 = vsub.s32 1, %v2419
    %v2421 = vrot.slane %v2407, %v2420
    %2423 = vbcast.lane.b32.xlu0 %v2421, 256
    %v2424 = vpop.permute.xlu0 %2423
    %v2425 = vlaneseq
    %v2426 = vshrl.u32 %v2425, 7
    %v2427 = vsub.s32 2, %v2426
    %v2428 = vrot.slane %v2407, %v2427
    %2430 = vbcast.lane.b32.xlu0 %v2428, 256
    %v2431 = vpop.permute.xlu0 %2430
    %v2432 = vlaneseq
    %v2433 = vshrl.u32 %v2432, 7
    %v2434 = vsub.s32 3, %v2433
    %v2435 = vrot.slane %v2407, %v2434
    %2437 = vbcast.lane.b32.xlu0 %v2435, 256
    %v2438 = vpop.permute.xlu0 %2437
    %v2439 = vlaneseq
    %v2440 = vshrl.u32 %v2439, 7
    %v2441 = vsub.s32 4, %v2440
    %v2442 = vrot.slane %v2407, %v2441
    %2444 = vbcast.lane.b32.xlu0 %v2442, 256
    %v2445 = vpop.permute.xlu0 %2444
    %v2446 = vlaneseq
    %v2447 = vshrl.u32 %v2446, 7
    %v2448 = vsub.s32 5, %v2447
    %v2449 = vrot.slane %v2407, %v2448
    %2451 = vbcast.lane.b32.xlu0 %v2449, 256
    %v2452 = vpop.permute.xlu0 %2451
    %v2453 = vlaneseq
    %v2454 = vshrl.u32 %v2453, 7
    %v2455 = vsub.s32 6, %v2454
    %v2456 = vrot.slane %v2407, %v2455
    %2458 = vbcast.lane.b32.xlu0 %v2456, 256
    %v2459 = vpop.permute.xlu0 %2458
    %v2460 = vlaneseq
    %v2461 = vshrl.u32 %v2460, 7
    %v2462 = vsub.s32 7, %v2461
    %v2463 = vrot.slane %v2407, %v2462
    %2465 = vbcast.lane.b32.xlu0 %v2463, 256
    %v2466 = vpop.permute.xlu0 %2465
    %v2467 = vmul.f32 %v2417, %v2208
    %v2468 = vmul.f32 %v2424, %v2209
    %v2469 = vmul.f32 %v2431, %v2210
    %v2470 = vmul.f32 %v2438, %v2211
    %v2471 = vmul.f32 %v2445, %v2212
    %v2472 = vmul.f32 %v2452, %v2213
    %v2473 = vmul.f32 %v2459, %v2214
    %v2474 = vmul.f32 %v2466, %v2215
    %v2475 = vsel %vm106, %v2467, 0.0
    %v2476 = vrot.slane %v2475, 4
    %v2477 = vadd.f32 %v2475, %v2476
    %v2478 = vrot.slane %v2477, 2
    %v2479 = vadd.f32 %v2477, %v2478
    %v2480 = vrot.slane %v2479, 1
    %v2481 = vadd.f32 %v2479, %v2480
    %v2482 = vsel %vm106, %v2468, 0.0
    %v2483 = vrot.slane %v2482, 4
    %v2484 = vadd.f32 %v2482, %v2483
    %v2485 = vrot.slane %v2484, 2
    %v2486 = vadd.f32 %v2484, %v2485
    %v2487 = vrot.slane %v2486, 1
    %v2488 = vadd.f32 %v2486, %v2487
    %v2489 = vsel %vm106, %v2469, 0.0
    %v2490 = vrot.slane %v2489, 4
    %v2491 = vadd.f32 %v2489, %v2490
    %v2492 = vrot.slane %v2491, 2
    %v2493 = vadd.f32 %v2491, %v2492
    %v2494 = vrot.slane %v2493, 1
    %v2495 = vadd.f32 %v2493, %v2494
    %v2496 = vsel %vm106, %v2470, 0.0
    %v2497 = vrot.slane %v2496, 4
    %v2498 = vadd.f32 %v2496, %v2497
    %v2499 = vrot.slane %v2498, 2
    %v2500 = vadd.f32 %v2498, %v2499
    %v2501 = vrot.slane %v2500, 1
    %v2502 = vadd.f32 %v2500, %v2501
    %v2503 = vsel %vm106, %v2471, 0.0
    %v2504 = vrot.slane %v2503, 4
    %v2505 = vadd.f32 %v2503, %v2504
    %v2506 = vrot.slane %v2505, 2
    %v2507 = vadd.f32 %v2505, %v2506
    %v2508 = vrot.slane %v2507, 1
    %v2509 = vadd.f32 %v2507, %v2508
    %v2510 = vsel %vm106, %v2472, 0.0
    %v2511 = vrot.slane %v2510, 4
    %v2512 = vadd.f32 %v2510, %v2511
    %v2513 = vrot.slane %v2512, 2
    %v2514 = vadd.f32 %v2512, %v2513
    %v2515 = vrot.slane %v2514, 1
    %v2516 = vadd.f32 %v2514, %v2515
    %v2517 = vsel %vm106, %v2473, 0.0
    %v2518 = vrot.slane %v2517, 4
    %v2519 = vadd.f32 %v2517, %v2518
    %v2520 = vrot.slane %v2519, 2
    %v2521 = vadd.f32 %v2519, %v2520
    %v2522 = vrot.slane %v2521, 1
    %v2523 = vadd.f32 %v2521, %v2522
    %v2524 = vsel %vm106, %v2474, 0.0
    %v2525 = vrot.slane %v2524, 4
    %v2526 = vadd.f32 %v2524, %v2525
    %v2527 = vrot.slane %v2526, 2
    %v2528 = vadd.f32 %v2526, %v2527
    %v2529 = vrot.slane %v2528, 1
    %v2530 = vadd.f32 %v2528, %v2529
    %v2531 = vsub.f32 0.0, %v2481
    %v2532 = vsub.f32 0.0, %v2488
    %v2533 = vsub.f32 0.0, %v2495
    %v2534 = vsub.f32 0.0, %v2502
    %v2535 = vsub.f32 0.0, %v2509
    %v2536 = vsub.f32 0.0, %v2516
    %v2537 = vsub.f32 0.0, %v2523
    %v2538 = vsub.f32 0.0, %v2530
    %v2539 = vrcp.pop %v2410
    %v2541 = vrot.slane %v2539, 1
    %v2542 = vrot.slane %v2539, 2
    %v2543 = vrot.slane %v2539, 3
    %v2544 = vrot.slane %v2539, 4
    %v2545 = vrot.slane %v2539, 5
    %v2546 = vrot.slane %v2539, 6
    %v2547 = vrot.slane %v2539, 7
    %v2556 = vmul.f32 %v2531, %v2539
    %v2557 = vmul.f32 %v2532, %v2541
    %v2558 = vmul.f32 %v2533, %v2542
    %v2559 = vmul.f32 %v2534, %v2543
    %v2560 = vmul.f32 %v2535, %v2544
    %v2561 = vmul.f32 %v2536, %v2545
    %v2562 = vmul.f32 %v2537, %v2546
    %v2563 = vmul.f32 %v2538, %v2547
    %v2564 = vmul.f32 %v709, %v2556
    %v2565 = vmul.f32 %v709, %v2557
    %v2566 = vmul.f32 %v709, %v2558
    %v2567 = vmul.f32 %v709, %v2559
    %v2568 = vmul.f32 %v709, %v2560
    %v2569 = vmul.f32 %v709, %v2561
    %v2570 = vmul.f32 %v709, %v2562
    %v2571 = vmul.f32 %v709, %v2563
    %v2580 = vrot.slane %v2565, 7
    %v2581 = vsel %vm530, %v2580, %v2564
    %v2582 = vrot.slane %v2566, 6
    %v2583 = vsel %vm532, %v2582, %v2581
    %v2584 = vrot.slane %v2567, 5
    %v2585 = vsel %vm534, %v2584, %v2583
    %v2586 = vrot.slane %v2568, 4
    %v2587 = vsel %vm536, %v2586, %v2585
    %v2588 = vrot.slane %v2569, 3
    %v2589 = vsel %vm538, %v2588, %v2587
    %v2590 = vrot.slane %v2570, 2
    %v2591 = vsel %vm540, %v2590, %v2589
    %v2592 = vrot.slane %v2571, 1
    %v2593 = vsel %vm542, %v2592, %v2591
    %v2595 = vadd.f32 %v1977, %v2593
    %v2596 = vld [vmem:[#allocation11] sm:$0xff]
    %v2597 = vld [vmem:[#allocation11 + $0x8] sm:$0xff]
    %v2598 = vld [vmem:[#allocation11 + $0x10] sm:$0xff]
    %v2599 = vld [vmem:[#allocation11 + $0x18] sm:$0xff]
    %v2600 = vld [vmem:[%s6] sm:$0x1]
    %v2602 = vlaneseq
    %v2603 = vshrl.u32 %v2602, 7
    %v2604 = vsub.s32 0, %v2603
    %v2605 = vrot.slane %v2600, %v2604
    %v2608 = vsel %vm106, %v2595, 0
    %2610 = vmatprep.subr.mxu0 0.0
    %2611 = vmatpush1.msra.mxu0 0.0
    %2612 = vmatprep.subr.mxu0 0.0
    %2613 = vmatpush1.msra.mxu0 0.0
    %2614 = vmatprep.subr.mxu0 0.0
    %2615 = vmatpush1.msra.mxu0 0.0
    %2616 = vmatprep.subr.mxu0 0.0
    %2617 = vmatpush1.msra.mxu0 0.0
    %2618 = vmatprep.subr.mxu0 0.0
    %2619 = vmatpush1.msra.mxu0 0.0
    %2620 = vmatprep.subr.mxu0 0.0
    %2621 = vmatpush1.msra.mxu0 0.0
    %2622 = vmatprep.subr.mxu0 0.0
    %2623 = vmatpush1.msra.mxu0 0.0
    %2624 = vmatprep.subr.mxu0 0.0
    %2625 = vmatpush1.msra.mxu0 0.0
    %2626 = vmatprep.subr.mxu0 0.0
    %2627 = vmatpush1.msra.mxu0 0.0
    %2628 = vmatprep.subr.mxu0 0.0
    %2629 = vmatpush1.msra.mxu0 0.0
    %2630 = vmatprep.subr.mxu0 0.0
    %2631 = vmatpush1.msra.mxu0 0.0
    %2632 = vmatprep.subr.mxu0 0.0
    %2633 = vmatpush1.msra.mxu0 0.0
    %2634 = vmatprep.subr.mxu0 0.0
    %2635 = vmatpush1.msra.mxu0 %v2599
    %2636 = vmatprep.subr.mxu0 0.0
    %2637 = vmatpush1.msra.mxu0 %v2598
    %2638 = vmatprep.subr.mxu0 0.0
    %2639 = vmatpush1.msra.mxu0 %v2597
    %2640 = vmatprep.subr.mxu0 0.0
    %2641 = vmatpush1.msra.mxu0 %v2596
    %2642 = vmatprep.subr.mxu0 0.0
    %2643 = vmatpush2.msra.mxu0 0.0
    %2644 = vmatprep.subr.mxu0 0.0
    %2645 = vmatpush2.msra.mxu0 0.0
    %2646 = vmatprep.subr.mxu0 0.0
    %2647 = vmatpush2.msra.mxu0 0.0
    %2648 = vmatprep.subr.mxu0 0.0
    %2649 = vmatpush2.msra.mxu0 0.0
    %2650 = vmatprep.subr.mxu0 0.0
    %2651 = vmatpush2.msra.mxu0 0.0
    %2652 = vmatprep.subr.mxu0 0.0
    %2653 = vmatpush2.msra.mxu0 0.0
    %2654 = vmatprep.subr.mxu0 0.0
    %2655 = vmatpush2.msra.mxu0 0.0
    %2656 = vmatprep.subr.mxu0 0.0
    %2657 = vmatpush2.msra.mxu0 0.0
    %2658 = vmatprep.subr.mxu0 0.0
    %2659 = vmatpush2.msra.mxu0 0.0
    %2660 = vmatprep.subr.mxu0 0.0
    %2661 = vmatpush2.msra.mxu0 0.0
    %2662 = vmatprep.subr.mxu0 0.0
    %2663 = vmatpush2.msra.mxu0 0.0
    %2664 = vmatprep.subr.mxu0 0.0
    %2665 = vmatpush2.msra.mxu0 0.0
    %2666 = vmatprep.subr.mxu0 0.0
    %2667 = vmatpush2.msra.mxu0 0.0
    %2668 = vmatprep.subr.mxu0 0.0
    %2669 = vmatpush2.msra.mxu0 0.0
    %2670 = vmatprep.subr.mxu0 0.0
    %2671 = vmatpush2.msra.mxu0 0.0
    %2672 = vmatprep.subr.mxu0 0.0
    %2673 = vmatpush2.msra.mxu0 0.0
    %2674 = vmatprep.mubr.f32.mxu0 0.0
    %2675 = vmatmul.mubr.f32.gmra.mxu0 %v2608
    %v2676 = vpop.f32.mrf.mxu0
    %v2677 = vadd.f32 %v2605, %v2676
    %v2678 = vpop.f32.mrf.mxu0
    %2679 = vdwg.mxu0
    %2680 = vst [vmem:[#allocation12] sm:$0xff] %v2677
    // Predicated region
    $region54: #{tpu_custom_call.1} parent=1 // pred_check
      _
    $region55: #{tpu_custom_call.1} parent=1 // pred_check_branch
      %2682 = sbr.rel (0) target = $region57
    $region56: #{tpu_custom_call.1} parent=1 // pred_region
      %s2684 = ssub.s32 128, 128
      %2685 = vsyncadd [#allocation5], %s2684
      %s2687 = sshll.u32 [#allocation12], 4
      %s2688 = int_to_ptr.vmem [resolvable:$true] %s2687
      %2690 = dma.vmem_to_hbm [thread:$0]  %s2688, 128, %s8, [#allocation5]
    $region57: #{tpu_custom_call.1} parent=1 // pred_fallthru
      _
    // Predicated region
    $region58: #{tpu_custom_call.1} parent=1 // pred_check
      _
    $region59: #{tpu_custom_call.1} parent=1 // pred_check_branch
      %2692 = sbr.rel (0) target = $region61
    $region60: #{tpu_custom_call.1} parent=1 // pred_region
      %2693 = dma.done [#allocation5], 128
    $region61: #{tpu_custom_call.1} parent=1 // pred_fallthru
      _
    %2694 = vsyncpa [#allocation4], 1
    %2695 = vsyncpa [#allocation7], 1
    %2696 = vsyncpa [#allocation10], 1
    %2697 = vsyncpa [#allocation5], 1

</llo_original>
